<compile_context>
chip_gen: v6e
topology: v6e:2x2x1
jax: 0.10.0
libtpu: 0.0.40
codegen_flags: <defaults>
</compile_context>

<pallas_src>
import math

import jax
import jax.numpy as jnp
from jax import lax
from jax.experimental import pallas as pl
from jax.experimental.pallas import tpu as pltpu


# ---------------------------------------------------------------------------
# Kernel factory
# ---------------------------------------------------------------------------
def _make_embedding_kernel(*, seq_len: int, s_tile: int, vocab: int,
                           d_model: int, eps: float = 1e-5):
    scale = float(d_model) ** 0.5
    unroll = max(1, min(8, s_tile))

    def kernel(ids_ref,          # SMEM  (B*S,)  int32   (scalar prefetch)
               w_hbm,            # HBM   (V, D)          (raw ref, manual DMA)
               pe_ref,           # VMEM  (s_tile, D) f32
               gamma_ref,        # VMEM  (1, D) f32
               beta_ref,         # VMEM  (1, D) f32
               out_ref,          # VMEM  (s_tile, D)     (leading batch dim squeezed)
               gbuf,             # VMEM scratch (2, s_tile, D)  weight dtype
               sem):             # DMA semaphores (2,) — one shared sem per slot
        s_idx = pl.program_id(0)
        b_idx = pl.program_id(1)
        n_b = pl.num_programs(1)
        slot = b_idx & 1

        def issue_tile(bb, sl):
            """Start one row DMA per token of tile (s_idx, bb) into gbuf[sl]."""
            base = bb * seq_len + s_idx * s_tile

            def body(j, carry):
                tok = ids_ref[base + j]
                row = jnp.clip(tok, 0, vocab - 1)          # clamp like w[ids]
                pltpu.make_async_copy(
                    w_hbm.at[pl.ds(row, 1), :],
                    gbuf.at[sl].at[pl.ds(j, 1), :],
                    sem.at[sl],                            # shared semaphore
                ).start()
                return carry

            lax.fori_loop(0, s_tile, body, 0, unroll=unroll)

        # Prime the chain: the first batch of this seq tile issues its own gather.
        @pl.when(b_idx == 0)
        def _():
            issue_tile(b_idx, slot)

        # Prefetch the NEXT batch's gather (same seq tile) into the other slot,
        # overlapping it with the current tile's wait + LayerNorm + writeback.
        @pl.when(b_idx + 1 < n_b)
        def _():
            issue_tile(b_idx + 1, 1 - slot)

        # Single bulk wait: dst is the whole (s_tile, D) slot, so the waited
        # byte count equals the sum of the s_tile row copies on this semaphore.
        pltpu.make_async_copy(
            w_hbm.at[pl.ds(0, s_tile), :],
            gbuf.at[slot],
            sem.at[slot],
        ).wait()

        # --- scale + positional encoding (f32 math) ---
        emb = gbuf[slot].astype(jnp.float32) * scale + pe_ref[...]

        # --- LayerNorm over d_model (lane axis) ---
        mean = jnp.mean(emb, axis=-1, keepdims=True)
        centered = emb - mean
        var = jnp.mean(centered * centered, axis=-1, keepdims=True)
        normed = centered * lax.rsqrt(var + eps)
        out = normed * gamma_ref[...] + beta_ref[...]

        # Dropout: identity (eval semantics).
        # TODO(synk): training-mode dropout would use pltpu.prng_seed/prng_random_bits.
        out_ref[...] = out.astype(out_ref.dtype)

    return kernel


def _pick_s_tile(seq_len: int) -> int:
    """Largest token tile <= 512 that divides S (multiple of 8 when tiling)."""
    if seq_len <= 512:
        return seq_len
    for t in (512, 256, 128, 64, 32, 16, 8):
        if seq_len % t == 0:
            return t
    return seq_len  # fallback: single full-length tile (shape-legal)


# ---------------------------------------------------------------------------
# Wrapper
# ---------------------------------------------------------------------------
def transformer_embedding(ids, emb_weight, pe_table, gamma, beta, *, eps=1e-5):
    """ids: (B, S) int32; emb_weight: (V, D); pe_table: (max_len, D)."""
    B, S = ids.shape
    V, D = emb_weight.shape
    s_tile = _pick_s_tile(S)
    n_s = S // s_tile
    assert S % s_tile == 0
    # Bulk-wait descriptor uses a (s_tile, D) window of the table as dummy src.
    assert V >= s_tile, "vocab must be >= token tile size"

    pe = pe_table[:S, :].astype(jnp.float32)         # (S, D)
    gamma2 = gamma.reshape(1, D).astype(jnp.float32)
    beta2 = beta.reshape(1, D).astype(jnp.float32)
    ids_flat = ids.reshape(B * S).astype(jnp.int32)

    kernel = _make_embedding_kernel(seq_len=S, s_tile=s_tile, vocab=V,
                                    d_model=D, eps=eps)

    grid_spec = pltpu.PrefetchScalarGridSpec(
        num_scalar_prefetch=1,                        # ids_flat -> SMEM
        grid=(n_s, B),                                # batch innermost: PE reused B times
        in_specs=[
            pl.BlockSpec(memory_space=pl.ANY),                        # weight: HBM
            pl.BlockSpec((s_tile, D), lambda s, b, ids: (s, 0)),      # PE tile (revisited)
            pl.BlockSpec((1, D), lambda s, b, ids: (0, 0)),           # gamma (resident)
            pl.BlockSpec((1, D), lambda s, b, ids: (0, 0)),           # beta  (resident)
        ],
        out_specs=pl.BlockSpec((pl.Squeezed(), s_tile, D),
                               lambda s, b, ids: (b, s, 0)),
        scratch_shapes=[
            pltpu.VMEM((2, s_tile, D), emb_weight.dtype),             # double gather buf
            pltpu.SemaphoreType.DMA((2,)),                            # one sem per slot
        ],
    )

    # gbuf(2x) + PE(2x pipelined) + out(2x pipelined) + margin; capped for v7x.
    vmem_limit = int(min(64 << 20, max(32 << 20, 12 * s_tile * D * 4)))

    return pl.pallas_call(
        kernel,
        out_shape=jax.ShapeDtypeStruct((B, S, D), jnp.float32),
        grid_spec=grid_spec,
        compiler_params=pltpu.CompilerParams(
            dimension_semantics=("parallel", "arbitrary"),
            vmem_limit_bytes=vmem_limit,
        ),
    )(ids_flat, emb_weight, pe, gamma2, beta2)


# ---------------------------------------------------------------------------
# Parameter / PE construction (plain JAX glue)
# ---------------------------------------------------------------------------
def make_sinusoidal_pe(max_len: int, d_model: int) -> jnp.ndarray:
    pos = jnp.arange(max_len, dtype=jnp.float32)[:, None]
    i = jnp.arange(0, d_model, 2, dtype=jnp.float32)[None, :]
    div = jnp.exp(-(math.log(10000.0)) * i / d_model)
    angles = pos * div
    pe = jnp.zeros((max_len, d_model), dtype=jnp.float32)
    pe = pe.at[:, 0::2].set(jnp.sin(angles))
    pe = pe.at[:, 1::2].set(jnp.cos(angles))
    return pe


def init_params(key, vocab_size: int, d_model: int):
    # nn.Embedding default init: N(0, 1); padding_idx=1 row is zeroed.
    w = jax.random.normal(key, (vocab_size, d_model), dtype=jnp.float32)
    w = w.at[1, :].set(0.0)
    gamma = jnp.ones((d_model,), dtype=jnp.float32)
    beta = jnp.zeros((d_model,), dtype=jnp.float32)
    return w, gamma, beta


# ---------------------------------------------------------------------------
# Pure-JAX reference
# ---------------------------------------------------------------------------
def reference(ids, w, pe_table, gamma, beta, eps=1e-5):
    D = w.shape[1]
    emb = w[ids] * (D ** 0.5) + pe_table[: ids.shape[1], :][None]
    mean = emb.mean(-1, keepdims=True)
    var = ((emb - mean) ** 2).mean(-1, keepdims=True)
    normed = (emb - mean) / jnp.sqrt(var + eps)
    return normed * gamma + beta


if __name__ == "__main__":
    B, S, D, V, MAX_LEN = 2, 8, 128, 64, 16
    key = jax.random.PRNGKey(0)
    k_ids, k_w = jax.random.split(key)

    ids = jax.random.randint(k_ids, (B, S), 0, V, dtype=jnp.int32)
    w, gamma, beta = init_params(k_w, V, D)
    pe_table = make_sinusoidal_pe(MAX_LEN, D)

    out = transformer_embedding(ids, w, pe_table, gamma, beta)
    out = jax.block_until_ready(out)

    ref = reference(ids, w, pe_table, gamma, beta)
    assert out.shape == (B, S, D)
    assert jnp.allclose(out, ref, atol=1e-4, rtol=1e-4), "mismatch vs reference"

    print("KERNEL_OK")
</pallas_src>

<mosaic_0001>
module attributes {stable_mosaic.version = 11 : i64} {
  func.func @kernel(%arg0: i32, %arg1: i32, %arg2: memref<16xi32, #tpu.memory_space<smem>>, %arg3: memref<64x128xf32, #tpu.memory_space<any>>, %arg4: memref<8x128xf32, #tpu.memory_space<vmem>>, %arg5: memref<1x128xf32, #tpu.memory_space<vmem>>, %arg6: memref<1x128xf32, #tpu.memory_space<vmem>>, %arg7: memref<1x8x128xf32, #tpu.memory_space<vmem>>, %arg8: memref<2x8x128xf32, #tpu.memory_space<vmem>>, %arg9: memref<2x!tpu.dma_semaphore, #tpu.memory_space<semaphore_mem>>) attributes {dimension_semantics = [#tpu.dimension_semantics<parallel>, #tpu.dimension_semantics<arbitrary>], iteration_bounds = array<i64: 1, 2>, scalar_prefetch = 1 : i64, scratch_operands = 2 : i64, tpu.core_type = #tpu.core_type<tc>, window_params = [{}, {transform_indices = @transform_1, window_bounds = array<i64: 8, 128>}, {pipeline_mode = #tpu.pipeline_mode<synchronous>, transform_indices = @transform_2, window_bounds = array<i64: 1, 128>}, {pipeline_mode = #tpu.pipeline_mode<synchronous>, transform_indices = @transform_3, window_bounds = array<i64: 1, 128>}, {transform_indices = @transform_4, window_bounds = array<i64: 1, 8, 128>}]} {
    %c1_i32 = arith.constant 1 : i32
    %0 = arith.andi %arg1, %c1_i32 : i32
    %c0_i32 = arith.constant 0 : i32
    %1 = arith.cmpi eq, %arg1, %c0_i32 : i32
    %2 = arith.extui %1 : i1 to i32
    %c0_i32_0 = arith.constant 0 : i32
    %3 = arith.cmpi ne, %2, %c0_i32_0 : i32
    scf.if %3 {
      %c8_i32 = arith.constant 8 : i32
      %45 = arith.muli %arg1, %c8_i32 : i32
      %c8_i32_22 = arith.constant 8 : i32
      %46 = arith.muli %arg0, %c8_i32_22 : i32
      %47 = arith.addi %45, %46 : i32
      %c0_i32_23 = arith.constant 0 : i32
      %48 = arith.addi %47, %c0_i32_23 : i32
      %49 = arith.index_cast %48 : i32 to index
      %50 = memref.load %arg2[%49] : memref<16xi32, #tpu.memory_space<smem>>
      %c0_i32_24 = arith.constant 0 : i32
      %c63_i32 = arith.constant 63 : i32
      %51 = arith.maxsi %c0_i32_24, %50 : i32
      %52 = arith.minsi %c63_i32, %51 : i32
      %c0_i32_25 = arith.constant 0 : i32
      %53 = tpu.memref_slice %arg3[%52, %c0_i32_25] : memref<64x128xf32, #tpu.memory_space<any>> -> memref<1x128xf32, #tpu.memory_space<any>>
      %c0_i32_26 = arith.constant 0 : i32
      %c0_i32_27 = arith.constant 0 : i32
      %54 = tpu.memref_slice %arg8[%0, %c0_i32_26, %c0_i32_27] : memref<2x8x128xf32, #tpu.memory_space<vmem>> -> memref<1x8x128xf32, #tpu.memory_space<vmem>>
      %55 = tpu.memref_squeeze %54 : memref<1x8x128xf32, #tpu.memory_space<vmem>> -> memref<8x128xf32, #tpu.memory_space<vmem>>
      %c0_i32_28 = arith.constant 0 : i32
      %56 = tpu.memref_slice %55[%c0_i32_23, %c0_i32_28] : memref<8x128xf32, #tpu.memory_space<vmem>> -> memref<1x128xf32, #tpu.memory_space<vmem>>
      %57 = tpu.memref_slice %arg9[%0] : memref<2x!tpu.dma_semaphore, #tpu.memory_space<semaphore_mem>> -> memref<1x!tpu.dma_semaphore, #tpu.memory_space<semaphore_mem>>
      %58 = tpu.memref_squeeze %57 : memref<1x!tpu.dma_semaphore, #tpu.memory_space<semaphore_mem>> -> memref<!tpu.dma_semaphore, #tpu.memory_space<semaphore_mem>>
      tpu.enqueue_dma source(%53 : memref<1x128xf32, #tpu.memory_space<any>>) target(%56 : memref<1x128xf32, #tpu.memory_space<vmem>>) target_semaphore(%58 : memref<!tpu.dma_semaphore, #tpu.memory_space<semaphore_mem>>)
      %c1_i32_29 = arith.constant 1 : i32
      %59 = arith.addi %47, %c1_i32_29 : i32
      %60 = arith.index_cast %59 : i32 to index
      %61 = memref.load %arg2[%60] : memref<16xi32, #tpu.memory_space<smem>>
      %c0_i32_30 = arith.constant 0 : i32
      %c63_i32_31 = arith.constant 63 : i32
      %62 = arith.maxsi %c0_i32_30, %61 : i32
      %63 = arith.minsi %c63_i32_31, %62 : i32
      %c0_i32_32 = arith.constant 0 : i32
      %64 = tpu.memref_slice %arg3[%63, %c0_i32_32] : memref<64x128xf32, #tpu.memory_space<any>> -> memref<1x128xf32, #tpu.memory_space<any>>
      %c0_i32_33 = arith.constant 0 : i32
      %c0_i32_34 = arith.constant 0 : i32
      %65 = tpu.memref_slice %arg8[%0, %c0_i32_33, %c0_i32_34] : memref<2x8x128xf32, #tpu.memory_space<vmem>> -> memref<1x8x128xf32, #tpu.memory_space<vmem>>
      %66 = tpu.memref_squeeze %65 : memref<1x8x128xf32, #tpu.memory_space<vmem>> -> memref<8x128xf32, #tpu.memory_space<vmem>>
      %c0_i32_35 = arith.constant 0 : i32
      %67 = tpu.memref_slice %66[%c1_i32_29, %c0_i32_35] : memref<8x128xf32, #tpu.memory_space<vmem>> -> memref<1x128xf32, #tpu.memory_space<vmem>>
      %68 = tpu.memref_slice %arg9[%0] : memref<2x!tpu.dma_semaphore, #tpu.memory_space<semaphore_mem>> -> memref<1x!tpu.dma_semaphore, #tpu.memory_space<semaphore_mem>>
      %69 = tpu.memref_squeeze %68 : memref<1x!tpu.dma_semaphore, #tpu.memory_space<semaphore_mem>> -> memref<!tpu.dma_semaphore, #tpu.memory_space<semaphore_mem>>
      tpu.enqueue_dma source(%64 : memref<1x128xf32, #tpu.memory_space<any>>) target(%67 : memref<1x128xf32, #tpu.memory_space<vmem>>) target_semaphore(%69 : memref<!tpu.dma_semaphore, #tpu.memory_space<semaphore_mem>>)
      %c2_i32_36 = arith.constant 2 : i32
      %70 = arith.addi %47, %c2_i32_36 : i32
      %71 = arith.index_cast %70 : i32 to index
      %72 = memref.load %arg2[%71] : memref<16xi32, #tpu.memory_space<smem>>
      %c0_i32_37 = arith.constant 0 : i32
      %c63_i32_38 = arith.constant 63 : i32
      %73 = arith.maxsi %c0_i32_37, %72 : i32
      %74 = arith.minsi %c63_i32_38, %73 : i32
      %c0_i32_39 = arith.constant 0 : i32
      %75 = tpu.memref_slice %arg3[%74, %c0_i32_39] : memref<64x128xf32, #tpu.memory_space<any>> -> memref<1x128xf32, #tpu.memory_space<any>>
      %c0_i32_40 = arith.constant 0 : i32
      %c0_i32_41 = arith.constant 0 : i32
      %76 = tpu.memref_slice %arg8[%0, %c0_i32_40, %c0_i32_41] : memref<2x8x128xf32, #tpu.memory_space<vmem>> -> memref<1x8x128xf32, #tpu.memory_space<vmem>>
      %77 = tpu.memref_squeeze %76 : memref<1x8x128xf32, #tpu.memory_space<vmem>> -> memref<8x128xf32, #tpu.memory_space<vmem>>
      %c0_i32_42 = arith.constant 0 : i32
      %78 = tpu.memref_slice %77[%c2_i32_36, %c0_i32_42] : memref<8x128xf32, #tpu.memory_space<vmem>> -> memref<1x128xf32, #tpu.memory_space<vmem>>
      %79 = tpu.memref_slice %arg9[%0] : memref<2x!tpu.dma_semaphore, #tpu.memory_space<semaphore_mem>> -> memref<1x!tpu.dma_semaphore, #tpu.memory_space<semaphore_mem>>
      %80 = tpu.memref_squeeze %79 : memref<1x!tpu.dma_semaphore, #tpu.memory_space<semaphore_mem>> -> memref<!tpu.dma_semaphore, #tpu.memory_space<semaphore_mem>>
      tpu.enqueue_dma source(%75 : memref<1x128xf32, #tpu.memory_space<any>>) target(%78 : memref<1x128xf32, #tpu.memory_space<vmem>>) target_semaphore(%80 : memref<!tpu.dma_semaphore, #tpu.memory_space<semaphore_mem>>)
      %c3_i32 = arith.constant 3 : i32
      %81 = arith.addi %47, %c3_i32 : i32
      %82 = arith.index_cast %81 : i32 to index
      %83 = memref.load %arg2[%82] : memref<16xi32, #tpu.memory_space<smem>>
      %c0_i32_43 = arith.constant 0 : i32
      %c63_i32_44 = arith.constant 63 : i32
      %84 = arith.maxsi %c0_i32_43, %83 : i32
      %85 = arith.minsi %c63_i32_44, %84 : i32
      %c0_i32_45 = arith.constant 0 : i32
      %86 = tpu.memref_slice %arg3[%85, %c0_i32_45] : memref<64x128xf32, #tpu.memory_space<any>> -> memref<1x128xf32, #tpu.memory_space<any>>
      %c0_i32_46 = arith.constant 0 : i32
      %c0_i32_47 = arith.constant 0 : i32
      %87 = tpu.memref_slice %arg8[%0, %c0_i32_46, %c0_i32_47] : memref<2x8x128xf32, #tpu.memory_space<vmem>> -> memref<1x8x128xf32, #tpu.memory_space<vmem>>
      %88 = tpu.memref_squeeze %87 : memref<1x8x128xf32, #tpu.memory_space<vmem>> -> memref<8x128xf32, #tpu.memory_space<vmem>>
      %c0_i32_48 = arith.constant 0 : i32
      %89 = tpu.memref_slice %88[%c3_i32, %c0_i32_48] : memref<8x128xf32, #tpu.memory_space<vmem>> -> memref<1x128xf32, #tpu.memory_space<vmem>>
      %90 = tpu.memref_slice %arg9[%0] : memref<2x!tpu.dma_semaphore, #tpu.memory_space<semaphore_mem>> -> memref<1x!tpu.dma_semaphore, #tpu.memory_space<semaphore_mem>>
      %91 = tpu.memref_squeeze %90 : memref<1x!tpu.dma_semaphore, #tpu.memory_space<semaphore_mem>> -> memref<!tpu.dma_semaphore, #tpu.memory_space<semaphore_mem>>
      tpu.enqueue_dma source(%86 : memref<1x128xf32, #tpu.memory_space<any>>) target(%89 : memref<1x128xf32, #tpu.memory_space<vmem>>) target_semaphore(%91 : memref<!tpu.dma_semaphore, #tpu.memory_space<semaphore_mem>>)
      %c4_i32 = arith.constant 4 : i32
      %92 = arith.addi %47, %c4_i32 : i32
      %93 = arith.index_cast %92 : i32 to index
      %94 = memref.load %arg2[%93] : memref<16xi32, #tpu.memory_space<smem>>
      %c0_i32_49 = arith.constant 0 : i32
      %c63_i32_50 = arith.constant 63 : i32
      %95 = arith.maxsi %c0_i32_49, %94 : i32
      %96 = arith.minsi %c63_i32_50, %95 : i32
      %c0_i32_51 = arith.constant 0 : i32
      %97 = tpu.memref_slice %arg3[%96, %c0_i32_51] : memref<64x128xf32, #tpu.memory_space<any>> -> memref<1x128xf32, #tpu.memory_space<any>>
      %c0_i32_52 = arith.constant 0 : i32
      %c0_i32_53 = arith.constant 0 : i32
      %98 = tpu.memref_slice %arg8[%0, %c0_i32_52, %c0_i32_53] : memref<2x8x128xf32, #tpu.memory_space<vmem>> -> memref<1x8x128xf32, #tpu.memory_space<vmem>>
      %99 = tpu.memref_squeeze %98 : memref<1x8x128xf32, #tpu.memory_space<vmem>> -> memref<8x128xf32, #tpu.memory_space<vmem>>
      %c0_i32_54 = arith.constant 0 : i32
      %100 = tpu.memref_slice %99[%c4_i32, %c0_i32_54] : memref<8x128xf32, #tpu.memory_space<vmem>> -> memref<1x128xf32, #tpu.memory_space<vmem>>
      %101 = tpu.memref_slice %arg9[%0] : memref<2x!tpu.dma_semaphore, #tpu.memory_space<semaphore_mem>> -> memref<1x!tpu.dma_semaphore, #tpu.memory_space<semaphore_mem>>
      %102 = tpu.memref_squeeze %101 : memref<1x!tpu.dma_semaphore, #tpu.memory_space<semaphore_mem>> -> memref<!tpu.dma_semaphore, #tpu.memory_space<semaphore_mem>>
      tpu.enqueue_dma source(%97 : memref<1x128xf32, #tpu.memory_space<any>>) target(%100 : memref<1x128xf32, #tpu.memory_space<vmem>>) target_semaphore(%102 : memref<!tpu.dma_semaphore, #tpu.memory_space<semaphore_mem>>)
      %c5_i32 = arith.constant 5 : i32
      %103 = arith.addi %47, %c5_i32 : i32
      %104 = arith.index_cast %103 : i32 to index
      %105 = memref.load %arg2[%104] : memref<16xi32, #tpu.memory_space<smem>>
      %c0_i32_55 = arith.constant 0 : i32
      %c63_i32_56 = arith.constant 63 : i32
      %106 = arith.maxsi %c0_i32_55, %105 : i32
      %107 = arith.minsi %c63_i32_56, %106 : i32
      %c0_i32_57 = arith.constant 0 : i32
      %108 = tpu.memref_slice %arg3[%107, %c0_i32_57] : memref<64x128xf32, #tpu.memory_space<any>> -> memref<1x128xf32, #tpu.memory_space<any>>
      %c0_i32_58 = arith.constant 0 : i32
      %c0_i32_59 = arith.constant 0 : i32
      %109 = tpu.memref_slice %arg8[%0, %c0_i32_58, %c0_i32_59] : memref<2x8x128xf32, #tpu.memory_space<vmem>> -> memref<1x8x128xf32, #tpu.memory_space<vmem>>
      %110 = tpu.memref_squeeze %109 : memref<1x8x128xf32, #tpu.memory_space<vmem>> -> memref<8x128xf32, #tpu.memory_space<vmem>>
      %c0_i32_60 = arith.constant 0 : i32
      %111 = tpu.memref_slice %110[%c5_i32, %c0_i32_60] : memref<8x128xf32, #tpu.memory_space<vmem>> -> memref<1x128xf32, #tpu.memory_space<vmem>>
      %112 = tpu.memref_slice %arg9[%0] : memref<2x!tpu.dma_semaphore, #tpu.memory_space<semaphore_mem>> -> memref<1x!tpu.dma_semaphore, #tpu.memory_space<semaphore_mem>>
      %113 = tpu.memref_squeeze %112 : memref<1x!tpu.dma_semaphore, #tpu.memory_space<semaphore_mem>> -> memref<!tpu.dma_semaphore, #tpu.memory_space<semaphore_mem>>
      tpu.enqueue_dma source(%108 : memref<1x128xf32, #tpu.memory_space<any>>) target(%111 : memref<1x128xf32, #tpu.memory_space<vmem>>) target_semaphore(%113 : memref<!tpu.dma_semaphore, #tpu.memory_space<semaphore_mem>>)
      %c6_i32 = arith.constant 6 : i32
      %114 = arith.addi %47, %c6_i32 : i32
      %115 = arith.index_cast %114 : i32 to index
      %116 = memref.load %arg2[%115] : memref<16xi32, #tpu.memory_space<smem>>
      %c0_i32_61 = arith.constant 0 : i32
      %c63_i32_62 = arith.constant 63 : i32
      %117 = arith.maxsi %c0_i32_61, %116 : i32
      %118 = arith.minsi %c63_i32_62, %117 : i32
      %c0_i32_63 = arith.constant 0 : i32
      %119 = tpu.memref_slice %arg3[%118, %c0_i32_63] : memref<64x128xf32, #tpu.memory_space<any>> -> memref<1x128xf32, #tpu.memory_space<any>>
      %c0_i32_64 = arith.constant 0 : i32
      %c0_i32_65 = arith.constant 0 : i32
      %120 = tpu.memref_slice %arg8[%0, %c0_i32_64, %c0_i32_65] : memref<2x8x128xf32, #tpu.memory_space<vmem>> -> memref<1x8x128xf32, #tpu.memory_space<vmem>>
      %121 = tpu.memref_squeeze %120 : memref<1x8x128xf32, #tpu.memory_space<vmem>> -> memref<8x128xf32, #tpu.memory_space<vmem>>
      %c0_i32_66 = arith.constant 0 : i32
      %122 = tpu.memref_slice %121[%c6_i32, %c0_i32_66] : memref<8x128xf32, #tpu.memory_space<vmem>> -> memref<1x128xf32, #tpu.memory_space<vmem>>
      %123 = tpu.memref_slice %arg9[%0] : memref<2x!tpu.dma_semaphore, #tpu.memory_space<semaphore_mem>> -> memref<1x!tpu.dma_semaphore, #tpu.memory_space<semaphore_mem>>
      %124 = tpu.memref_squeeze %123 : memref<1x!tpu.dma_semaphore, #tpu.memory_space<semaphore_mem>> -> memref<!tpu.dma_semaphore, #tpu.memory_space<semaphore_mem>>
      tpu.enqueue_dma source(%119 : memref<1x128xf32, #tpu.memory_space<any>>) target(%122 : memref<1x128xf32, #tpu.memory_space<vmem>>) target_semaphore(%124 : memref<!tpu.dma_semaphore, #tpu.memory_space<semaphore_mem>>)
      %c7_i32 = arith.constant 7 : i32
      %125 = arith.addi %47, %c7_i32 : i32
      %126 = arith.index_cast %125 : i32 to index
      %127 = memref.load %arg2[%126] : memref<16xi32, #tpu.memory_space<smem>>
      %c0_i32_67 = arith.constant 0 : i32
      %c63_i32_68 = arith.constant 63 : i32
      %128 = arith.maxsi %c0_i32_67, %127 : i32
      %129 = arith.minsi %c63_i32_68, %128 : i32
      %c0_i32_69 = arith.constant 0 : i32
      %130 = tpu.memref_slice %arg3[%129, %c0_i32_69] : memref<64x128xf32, #tpu.memory_space<any>> -> memref<1x128xf32, #tpu.memory_space<any>>
      %c0_i32_70 = arith.constant 0 : i32
      %c0_i32_71 = arith.constant 0 : i32
      %131 = tpu.memref_slice %arg8[%0, %c0_i32_70, %c0_i32_71] : memref<2x8x128xf32, #tpu.memory_space<vmem>> -> memref<1x8x128xf32, #tpu.memory_space<vmem>>
      %132 = tpu.memref_squeeze %131 : memref<1x8x128xf32, #tpu.memory_space<vmem>> -> memref<8x128xf32, #tpu.memory_space<vmem>>
      %c0_i32_72 = arith.constant 0 : i32
      %133 = tpu.memref_slice %132[%c7_i32, %c0_i32_72] : memref<8x128xf32, #tpu.memory_space<vmem>> -> memref<1x128xf32, #tpu.memory_space<vmem>>
      %134 = tpu.memref_slice %arg9[%0] : memref<2x!tpu.dma_semaphore, #tpu.memory_space<semaphore_mem>> -> memref<1x!tpu.dma_semaphore, #tpu.memory_space<semaphore_mem>>
      %135 = tpu.memref_squeeze %134 : memref<1x!tpu.dma_semaphore, #tpu.memory_space<semaphore_mem>> -> memref<!tpu.dma_semaphore, #tpu.memory_space<semaphore_mem>>
      tpu.enqueue_dma source(%130 : memref<1x128xf32, #tpu.memory_space<any>>) target(%133 : memref<1x128xf32, #tpu.memory_space<vmem>>) target_semaphore(%135 : memref<!tpu.dma_semaphore, #tpu.memory_space<semaphore_mem>>)
      %c8_i32_73 = arith.constant 8 : i32
    } else {
    }
    %c1_i32_1 = arith.constant 1 : i32
    %4 = arith.addi %arg1, %c1_i32_1 : i32
    %c2_i32 = arith.constant 2 : i32
    %5 = arith.cmpi slt, %4, %c2_i32 : i32
    %6 = arith.extui %5 : i1 to i32
    %c0_i32_2 = arith.constant 0 : i32
    %7 = arith.cmpi ne, %6, %c0_i32_2 : i32
    scf.if %7 {
      %c1_i32_22 = arith.constant 1 : i32
      %45 = arith.addi %arg1, %c1_i32_22 : i32
      %c1_i32_23 = arith.constant 1 : i32
      %46 = arith.subi %c1_i32_23, %0 : i32
      %c8_i32 = arith.constant 8 : i32
      %47 = arith.muli %45, %c8_i32 : i32
      %c8_i32_24 = arith.constant 8 : i32
      %48 = arith.muli %arg0, %c8_i32_24 : i32
      %49 = arith.addi %47, %48 : i32
      %c0_i32_25 = arith.constant 0 : i32
      %50 = arith.addi %49, %c0_i32_25 : i32
      %51 = arith.index_cast %50 : i32 to index
      %52 = memref.load %arg2[%51] : memref<16xi32, #tpu.memory_space<smem>>
      %c0_i32_26 = arith.constant 0 : i32
      %c63_i32 = arith.constant 63 : i32
      %53 = arith.maxsi %c0_i32_26, %52 : i32
      %54 = arith.minsi %c63_i32, %53 : i32
      %c0_i32_27 = arith.constant 0 : i32
      %55 = tpu.memref_slice %arg3[%54, %c0_i32_27] : memref<64x128xf32, #tpu.memory_space<any>> -> memref<1x128xf32, #tpu.memory_space<any>>
      %c0_i32_28 = arith.constant 0 : i32
      %c0_i32_29 = arith.constant 0 : i32
      %56 = tpu.memref_slice %arg8[%46, %c0_i32_28, %c0_i32_29] : memref<2x8x128xf32, #tpu.memory_space<vmem>> -> memref<1x8x128xf32, #tpu.memory_space<vmem>>
      %57 = tpu.memref_squeeze %56 : memref<1x8x128xf32, #tpu.memory_space<vmem>> -> memref<8x128xf32, #tpu.memory_space<vmem>>
      %c0_i32_30 = arith.constant 0 : i32
      %58 = tpu.memref_slice %57[%c0_i32_25, %c0_i32_30] : memref<8x128xf32, #tpu.memory_space<vmem>> -> memref<1x128xf32, #tpu.memory_space<vmem>>
      %59 = tpu.memref_slice %arg9[%46] : memref<2x!tpu.dma_semaphore, #tpu.memory_space<semaphore_mem>> -> memref<1x!tpu.dma_semaphore, #tpu.memory_space<semaphore_mem>>
      %60 = tpu.memref_squeeze %59 : memref<1x!tpu.dma_semaphore, #tpu.memory_space<semaphore_mem>> -> memref<!tpu.dma_semaphore, #tpu.memory_space<semaphore_mem>>
      tpu.enqueue_dma source(%55 : memref<1x128xf32, #tpu.memory_space<any>>) target(%58 : memref<1x128xf32, #tpu.memory_space<vmem>>) target_semaphore(%60 : memref<!tpu.dma_semaphore, #tpu.memory_space<semaphore_mem>>)
      %c1_i32_31 = arith.constant 1 : i32
      %61 = arith.addi %49, %c1_i32_31 : i32
      %62 = arith.index_cast %61 : i32 to index
      %63 = memref.load %arg2[%62] : memref<16xi32, #tpu.memory_space<smem>>
      %c0_i32_32 = arith.constant 0 : i32
      %c63_i32_33 = arith.constant 63 : i32
      %64 = arith.maxsi %c0_i32_32, %63 : i32
      %65 = arith.minsi %c63_i32_33, %64 : i32
      %c0_i32_34 = arith.constant 0 : i32
      %66 = tpu.memref_slice %arg3[%65, %c0_i32_34] : memref<64x128xf32, #tpu.memory_space<any>> -> memref<1x128xf32, #tpu.memory_space<any>>
      %c0_i32_35 = arith.constant 0 : i32
      %c0_i32_36 = arith.constant 0 : i32
      %67 = tpu.memref_slice %arg8[%46, %c0_i32_35, %c0_i32_36] : memref<2x8x128xf32, #tpu.memory_space<vmem>> -> memref<1x8x128xf32, #tpu.memory_space<vmem>>
      %68 = tpu.memref_squeeze %67 : memref<1x8x128xf32, #tpu.memory_space<vmem>> -> memref<8x128xf32, #tpu.memory_space<vmem>>
      %c0_i32_37 = arith.constant 0 : i32
      %69 = tpu.memref_slice %68[%c1_i32_31, %c0_i32_37] : memref<8x128xf32, #tpu.memory_space<vmem>> -> memref<1x128xf32, #tpu.memory_space<vmem>>
      %70 = tpu.memref_slice %arg9[%46] : memref<2x!tpu.dma_semaphore, #tpu.memory_space<semaphore_mem>> -> memref<1x!tpu.dma_semaphore, #tpu.memory_space<semaphore_mem>>
      %71 = tpu.memref_squeeze %70 : memref<1x!tpu.dma_semaphore, #tpu.memory_space<semaphore_mem>> -> memref<!tpu.dma_semaphore, #tpu.memory_space<semaphore_mem>>
      tpu.enqueue_dma source(%66 : memref<1x128xf32, #tpu.memory_space<any>>) target(%69 : memref<1x128xf32, #tpu.memory_space<vmem>>) target_semaphore(%71 : memref<!tpu.dma_semaphore, #tpu.memory_space<semaphore_mem>>)
      %c2_i32_38 = arith.constant 2 : i32
      %72 = arith.addi %49, %c2_i32_38 : i32
      %73 = arith.index_cast %72 : i32 to index
      %74 = memref.load %arg2[%73] : memref<16xi32, #tpu.memory_space<smem>>
      %c0_i32_39 = arith.constant 0 : i32
      %c63_i32_40 = arith.constant 63 : i32
      %75 = arith.maxsi %c0_i32_39, %74 : i32
      %76 = arith.minsi %c63_i32_40, %75 : i32
      %c0_i32_41 = arith.constant 0 : i32
      %77 = tpu.memref_slice %arg3[%76, %c0_i32_41] : memref<64x128xf32, #tpu.memory_space<any>> -> memref<1x128xf32, #tpu.memory_space<any>>
      %c0_i32_42 = arith.constant 0 : i32
      %c0_i32_43 = arith.constant 0 : i32
      %78 = tpu.memref_slice %arg8[%46, %c0_i32_42, %c0_i32_43] : memref<2x8x128xf32, #tpu.memory_space<vmem>> -> memref<1x8x128xf32, #tpu.memory_space<vmem>>
      %79 = tpu.memref_squeeze %78 : memref<1x8x128xf32, #tpu.memory_space<vmem>> -> memref<8x128xf32, #tpu.memory_space<vmem>>
      %c0_i32_44 = arith.constant 0 : i32
      %80 = tpu.memref_slice %79[%c2_i32_38, %c0_i32_44] : memref<8x128xf32, #tpu.memory_space<vmem>> -> memref<1x128xf32, #tpu.memory_space<vmem>>
      %81 = tpu.memref_slice %arg9[%46] : memref<2x!tpu.dma_semaphore, #tpu.memory_space<semaphore_mem>> -> memref<1x!tpu.dma_semaphore, #tpu.memory_space<semaphore_mem>>
      %82 = tpu.memref_squeeze %81 : memref<1x!tpu.dma_semaphore, #tpu.memory_space<semaphore_mem>> -> memref<!tpu.dma_semaphore, #tpu.memory_space<semaphore_mem>>
      tpu.enqueue_dma source(%77 : memref<1x128xf32, #tpu.memory_space<any>>) target(%80 : memref<1x128xf32, #tpu.memory_space<vmem>>) target_semaphore(%82 : memref<!tpu.dma_semaphore, #tpu.memory_space<semaphore_mem>>)
      %c3_i32 = arith.constant 3 : i32
      %83 = arith.addi %49, %c3_i32 : i32
      %84 = arith.index_cast %83 : i32 to index
      %85 = memref.load %arg2[%84] : memref<16xi32, #tpu.memory_space<smem>>
      %c0_i32_45 = arith.constant 0 : i32
      %c63_i32_46 = arith.constant 63 : i32
      %86 = arith.maxsi %c0_i32_45, %85 : i32
      %87 = arith.minsi %c63_i32_46, %86 : i32
      %c0_i32_47 = arith.constant 0 : i32
      %88 = tpu.memref_slice %arg3[%87, %c0_i32_47] : memref<64x128xf32, #tpu.memory_space<any>> -> memref<1x128xf32, #tpu.memory_space<any>>
      %c0_i32_48 = arith.constant 0 : i32
      %c0_i32_49 = arith.constant 0 : i32
      %89 = tpu.memref_slice %arg8[%46, %c0_i32_48, %c0_i32_49] : memref<2x8x128xf32, #tpu.memory_space<vmem>> -> memref<1x8x128xf32, #tpu.memory_space<vmem>>
      %90 = tpu.memref_squeeze %89 : memref<1x8x128xf32, #tpu.memory_space<vmem>> -> memref<8x128xf32, #tpu.memory_space<vmem>>
      %c0_i32_50 = arith.constant 0 : i32
      %91 = tpu.memref_slice %90[%c3_i32, %c0_i32_50] : memref<8x128xf32, #tpu.memory_space<vmem>> -> memref<1x128xf32, #tpu.memory_space<vmem>>
      %92 = tpu.memref_slice %arg9[%46] : memref<2x!tpu.dma_semaphore, #tpu.memory_space<semaphore_mem>> -> memref<1x!tpu.dma_semaphore, #tpu.memory_space<semaphore_mem>>
      %93 = tpu.memref_squeeze %92 : memref<1x!tpu.dma_semaphore, #tpu.memory_space<semaphore_mem>> -> memref<!tpu.dma_semaphore, #tpu.memory_space<semaphore_mem>>
      tpu.enqueue_dma source(%88 : memref<1x128xf32, #tpu.memory_space<any>>) target(%91 : memref<1x128xf32, #tpu.memory_space<vmem>>) target_semaphore(%93 : memref<!tpu.dma_semaphore, #tpu.memory_space<semaphore_mem>>)
      %c4_i32 = arith.constant 4 : i32
      %94 = arith.addi %49, %c4_i32 : i32
      %95 = arith.index_cast %94 : i32 to index
      %96 = memref.load %arg2[%95] : memref<16xi32, #tpu.memory_space<smem>>
      %c0_i32_51 = arith.constant 0 : i32
      %c63_i32_52 = arith.constant 63 : i32
      %97 = arith.maxsi %c0_i32_51, %96 : i32
      %98 = arith.minsi %c63_i32_52, %97 : i32
      %c0_i32_53 = arith.constant 0 : i32
      %99 = tpu.memref_slice %arg3[%98, %c0_i32_53] : memref<64x128xf32, #tpu.memory_space<any>> -> memref<1x128xf32, #tpu.memory_space<any>>
      %c0_i32_54 = arith.constant 0 : i32
      %c0_i32_55 = arith.constant 0 : i32
      %100 = tpu.memref_slice %arg8[%46, %c0_i32_54, %c0_i32_55] : memref<2x8x128xf32, #tpu.memory_space<vmem>> -> memref<1x8x128xf32, #tpu.memory_space<vmem>>
      %101 = tpu.memref_squeeze %100 : memref<1x8x128xf32, #tpu.memory_space<vmem>> -> memref<8x128xf32, #tpu.memory_space<vmem>>
      %c0_i32_56 = arith.constant 0 : i32
      %102 = tpu.memref_slice %101[%c4_i32, %c0_i32_56] : memref<8x128xf32, #tpu.memory_space<vmem>> -> memref<1x128xf32, #tpu.memory_space<vmem>>
      %103 = tpu.memref_slice %arg9[%46] : memref<2x!tpu.dma_semaphore, #tpu.memory_space<semaphore_mem>> -> memref<1x!tpu.dma_semaphore, #tpu.memory_space<semaphore_mem>>
      %104 = tpu.memref_squeeze %103 : memref<1x!tpu.dma_semaphore, #tpu.memory_space<semaphore_mem>> -> memref<!tpu.dma_semaphore, #tpu.memory_space<semaphore_mem>>
      tpu.enqueue_dma source(%99 : memref<1x128xf32, #tpu.memory_space<any>>) target(%102 : memref<1x128xf32, #tpu.memory_space<vmem>>) target_semaphore(%104 : memref<!tpu.dma_semaphore, #tpu.memory_space<semaphore_mem>>)
      %c5_i32 = arith.constant 5 : i32
      %105 = arith.addi %49, %c5_i32 : i32
      %106 = arith.index_cast %105 : i32 to index
      %107 = memref.load %arg2[%106] : memref<16xi32, #tpu.memory_space<smem>>
      %c0_i32_57 = arith.constant 0 : i32
      %c63_i32_58 = arith.constant 63 : i32
      %108 = arith.maxsi %c0_i32_57, %107 : i32
      %109 = arith.minsi %c63_i32_58, %108 : i32
      %c0_i32_59 = arith.constant 0 : i32
      %110 = tpu.memref_slice %arg3[%109, %c0_i32_59] : memref<64x128xf32, #tpu.memory_space<any>> -> memref<1x128xf32, #tpu.memory_space<any>>
      %c0_i32_60 = arith.constant 0 : i32
      %c0_i32_61 = arith.constant 0 : i32
      %111 = tpu.memref_slice %arg8[%46, %c0_i32_60, %c0_i32_61] : memref<2x8x128xf32, #tpu.memory_space<vmem>> -> memref<1x8x128xf32, #tpu.memory_space<vmem>>
      %112 = tpu.memref_squeeze %111 : memref<1x8x128xf32, #tpu.memory_space<vmem>> -> memref<8x128xf32, #tpu.memory_space<vmem>>
      %c0_i32_62 = arith.constant 0 : i32
      %113 = tpu.memref_slice %112[%c5_i32, %c0_i32_62] : memref<8x128xf32, #tpu.memory_space<vmem>> -> memref<1x128xf32, #tpu.memory_space<vmem>>
      %114 = tpu.memref_slice %arg9[%46] : memref<2x!tpu.dma_semaphore, #tpu.memory_space<semaphore_mem>> -> memref<1x!tpu.dma_semaphore, #tpu.memory_space<semaphore_mem>>
      %115 = tpu.memref_squeeze %114 : memref<1x!tpu.dma_semaphore, #tpu.memory_space<semaphore_mem>> -> memref<!tpu.dma_semaphore, #tpu.memory_space<semaphore_mem>>
      tpu.enqueue_dma source(%110 : memref<1x128xf32, #tpu.memory_space<any>>) target(%113 : memref<1x128xf32, #tpu.memory_space<vmem>>) target_semaphore(%115 : memref<!tpu.dma_semaphore, #tpu.memory_space<semaphore_mem>>)
      %c6_i32 = arith.constant 6 : i32
      %116 = arith.addi %49, %c6_i32 : i32
      %117 = arith.index_cast %116 : i32 to index
      %118 = memref.load %arg2[%117] : memref<16xi32, #tpu.memory_space<smem>>
      %c0_i32_63 = arith.constant 0 : i32
      %c63_i32_64 = arith.constant 63 : i32
      %119 = arith.maxsi %c0_i32_63, %118 : i32
      %120 = arith.minsi %c63_i32_64, %119 : i32
      %c0_i32_65 = arith.constant 0 : i32
      %121 = tpu.memref_slice %arg3[%120, %c0_i32_65] : memref<64x128xf32, #tpu.memory_space<any>> -> memref<1x128xf32, #tpu.memory_space<any>>
      %c0_i32_66 = arith.constant 0 : i32
      %c0_i32_67 = arith.constant 0 : i32
      %122 = tpu.memref_slice %arg8[%46, %c0_i32_66, %c0_i32_67] : memref<2x8x128xf32, #tpu.memory_space<vmem>> -> memref<1x8x128xf32, #tpu.memory_space<vmem>>
      %123 = tpu.memref_squeeze %122 : memref<1x8x128xf32, #tpu.memory_space<vmem>> -> memref<8x128xf32, #tpu.memory_space<vmem>>
      %c0_i32_68 = arith.constant 0 : i32
      %124 = tpu.memref_slice %123[%c6_i32, %c0_i32_68] : memref<8x128xf32, #tpu.memory_space<vmem>> -> memref<1x128xf32, #tpu.memory_space<vmem>>
      %125 = tpu.memref_slice %arg9[%46] : memref<2x!tpu.dma_semaphore, #tpu.memory_space<semaphore_mem>> -> memref<1x!tpu.dma_semaphore, #tpu.memory_space<semaphore_mem>>
      %126 = tpu.memref_squeeze %125 : memref<1x!tpu.dma_semaphore, #tpu.memory_space<semaphore_mem>> -> memref<!tpu.dma_semaphore, #tpu.memory_space<semaphore_mem>>
      tpu.enqueue_dma source(%121 : memref<1x128xf32, #tpu.memory_space<any>>) target(%124 : memref<1x128xf32, #tpu.memory_space<vmem>>) target_semaphore(%126 : memref<!tpu.dma_semaphore, #tpu.memory_space<semaphore_mem>>)
      %c7_i32 = arith.constant 7 : i32
      %127 = arith.addi %49, %c7_i32 : i32
      %128 = arith.index_cast %127 : i32 to index
      %129 = memref.load %arg2[%128] : memref<16xi32, #tpu.memory_space<smem>>
      %c0_i32_69 = arith.constant 0 : i32
      %c63_i32_70 = arith.constant 63 : i32
      %130 = arith.maxsi %c0_i32_69, %129 : i32
      %131 = arith.minsi %c63_i32_70, %130 : i32
      %c0_i32_71 = arith.constant 0 : i32
      %132 = tpu.memref_slice %arg3[%131, %c0_i32_71] : memref<64x128xf32, #tpu.memory_space<any>> -> memref<1x128xf32, #tpu.memory_space<any>>
      %c0_i32_72 = arith.constant 0 : i32
      %c0_i32_73 = arith.constant 0 : i32
      %133 = tpu.memref_slice %arg8[%46, %c0_i32_72, %c0_i32_73] : memref<2x8x128xf32, #tpu.memory_space<vmem>> -> memref<1x8x128xf32, #tpu.memory_space<vmem>>
      %134 = tpu.memref_squeeze %133 : memref<1x8x128xf32, #tpu.memory_space<vmem>> -> memref<8x128xf32, #tpu.memory_space<vmem>>
      %c0_i32_74 = arith.constant 0 : i32
      %135 = tpu.memref_slice %134[%c7_i32, %c0_i32_74] : memref<8x128xf32, #tpu.memory_space<vmem>> -> memref<1x128xf32, #tpu.memory_space<vmem>>
      %136 = tpu.memref_slice %arg9[%46] : memref<2x!tpu.dma_semaphore, #tpu.memory_space<semaphore_mem>> -> memref<1x!tpu.dma_semaphore, #tpu.memory_space<semaphore_mem>>
      %137 = tpu.memref_squeeze %136 : memref<1x!tpu.dma_semaphore, #tpu.memory_space<semaphore_mem>> -> memref<!tpu.dma_semaphore, #tpu.memory_space<semaphore_mem>>
      tpu.enqueue_dma source(%132 : memref<1x128xf32, #tpu.memory_space<any>>) target(%135 : memref<1x128xf32, #tpu.memory_space<vmem>>) target_semaphore(%137 : memref<!tpu.dma_semaphore, #tpu.memory_space<semaphore_mem>>)
      %c8_i32_75 = arith.constant 8 : i32
    } else {
    }
    %c0_i32_3 = arith.constant 0 : i32
    %c0_i32_4 = arith.constant 0 : i32
    %8 = tpu.memref_slice %arg3[%c0_i32_3, %c0_i32_4] : memref<64x128xf32, #tpu.memory_space<any>> -> memref<8x128xf32, #tpu.memory_space<any>>
    %c0_i32_5 = arith.constant 0 : i32
    %c0_i32_6 = arith.constant 0 : i32
    %9 = tpu.memref_slice %arg8[%0, %c0_i32_5, %c0_i32_6] : memref<2x8x128xf32, #tpu.memory_space<vmem>> -> memref<1x8x128xf32, #tpu.memory_space<vmem>>
    %10 = tpu.memref_squeeze %9 : memref<1x8x128xf32, #tpu.memory_space<vmem>> -> memref<8x128xf32, #tpu.memory_space<vmem>>
    %11 = tpu.memref_slice %arg9[%0] : memref<2x!tpu.dma_semaphore, #tpu.memory_space<semaphore_mem>> -> memref<1x!tpu.dma_semaphore, #tpu.memory_space<semaphore_mem>>
    %12 = tpu.memref_squeeze %11 : memref<1x!tpu.dma_semaphore, #tpu.memory_space<semaphore_mem>> -> memref<!tpu.dma_semaphore, #tpu.memory_space<semaphore_mem>>
    tpu.wait_dma2 semaphore(%12 : memref<!tpu.dma_semaphore, #tpu.memory_space<semaphore_mem>>) src(%8 : memref<8x128xf32, #tpu.memory_space<any>>) dst(%10 : memref<8x128xf32, #tpu.memory_space<vmem>>)
    %13 = arith.index_cast %0 : i32 to index
    %c0 = arith.constant 0 : index
    %c0_7 = arith.constant 0 : index
    %14 = vector.load %arg8[%13, %c0, %c0_7] : memref<2x8x128xf32, #tpu.memory_space<vmem>>, vector<1x8x128xf32>
    %15 = vector.shape_cast %14 : vector<1x8x128xf32> to vector<8x128xf32>
    %cst = arith.constant 11.3137083 : f32
    %16 = vector.broadcast %cst : f32 to vector<8x128xf32>
    %17 = arith.mulf %15, %16 : vector<8x128xf32>
    %c0_8 = arith.constant 0 : index
    %c0_9 = arith.constant 0 : index
    %18 = vector.load %arg4[%c0_8, %c0_9] : memref<8x128xf32, #tpu.memory_space<vmem>>, vector<8x128xf32>
    %19 = arith.addf %17, %18 : vector<8x128xf32>
    %cst_10 = arith.constant dense<0.000000e+00> : vector<8xf32>
    %20 = vector.multi_reduction <add>, %19, %cst_10 [1] : vector<8x128xf32> to vector<8xf32>
    %21 = vector.shape_cast %20 : vector<8xf32> to vector<8x1xf32>
    %cst_11 = arith.constant 1.280000e+02 : f32
    %22 = vector.broadcast %cst_11 : f32 to vector<8x1xf32>
    %23 = arith.divf %21, %22 : vector<8x1xf32>
    %24 = vector.broadcast %23 : vector<8x1xf32> to vector<8x128xf32>
    %25 = arith.subf %19, %24 : vector<8x128xf32>
    %26 = arith.mulf %25, %25 : vector<8x128xf32>
    %cst_12 = arith.constant dense<0.000000e+00> : vector<8xf32>
    %27 = vector.multi_reduction <add>, %26, %cst_12 [1] : vector<8x128xf32> to vector<8xf32>
    %28 = vector.shape_cast %27 : vector<8xf32> to vector<8x1xf32>
    %cst_13 = arith.constant 1.280000e+02 : f32
    %29 = vector.broadcast %cst_13 : f32 to vector<8x1xf32>
    %30 = arith.divf %28, %29 : vector<8x1xf32>
    %cst_14 = arith.constant 9.99999974E-6 : f32
    %31 = vector.broadcast %cst_14 : f32 to vector<8x1xf32>
    %32 = arith.addf %30, %31 : vector<8x1xf32>
    %33 = math.rsqrt %32 : vector<8x1xf32>
    %34 = vector.broadcast %33 : vector<8x1xf32> to vector<8x128xf32>
    %35 = arith.mulf %25, %34 : vector<8x128xf32>
    %c0_15 = arith.constant 0 : index
    %c0_16 = arith.constant 0 : index
    %36 = vector.load %arg5[%c0_15, %c0_16] : memref<1x128xf32, #tpu.memory_space<vmem>>, vector<1x128xf32>
    %37 = vector.broadcast %36 : vector<1x128xf32> to vector<8x128xf32>
    %38 = arith.mulf %35, %37 : vector<8x128xf32>
    %c0_17 = arith.constant 0 : index
    %c0_18 = arith.constant 0 : index
    %39 = vector.load %arg6[%c0_17, %c0_18] : memref<1x128xf32, #tpu.memory_space<vmem>>, vector<1x128xf32>
    %40 = vector.broadcast %39 : vector<1x128xf32> to vector<8x128xf32>
    %41 = arith.addf %38, %40 : vector<8x128xf32>
    %c0_19 = arith.constant 0 : index
    %c0_20 = arith.constant 0 : index
    %c0_21 = arith.constant 0 : index
    %42 = vector.load %arg7[%c0_19, %c0_20, %c0_21] : memref<1x8x128xf32, #tpu.memory_space<vmem>>, vector<1x8x128xf32>
    %43 = vector.shape_cast %42 : vector<1x8x128xf32> to vector<8x128xf32>
    %44 = vector.shape_cast %41 : vector<8x128xf32> to vector<1x8x128xf32>
    tpu.vector_store %arg7[%c0_19, %c0_20, %c0_21], %44 {strides = array<i32>} : memref<1x8x128xf32, #tpu.memory_space<vmem>>, vector<1x8x128xf32>,
    return
  }
  func.func @transform_1(%arg0: i32, %arg1: i32, %arg2: memref<16xi32, #tpu.memory_space<smem>>) -> (i32, i32) {
    %c0_i32 = arith.constant 0 : i32
    %c0_i32_0 = arith.constant 0 : i32
    return %arg0, %c0_i32 : i32, i32
  }
  func.func @transform_2(%arg0: i32, %arg1: i32, %arg2: memref<16xi32, #tpu.memory_space<smem>>) -> (i32, i32) {
    %c0_i32 = arith.constant 0 : i32
    %c0_i32_0 = arith.constant 0 : i32
    %c0_i32_1 = arith.constant 0 : i32
    return %c0_i32, %c0_i32_0 : i32, i32
  }
  func.func @transform_3(%arg0: i32, %arg1: i32, %arg2: memref<16xi32, #tpu.memory_space<smem>>) -> (i32, i32) {
    %c0_i32 = arith.constant 0 : i32
    %c0_i32_0 = arith.constant 0 : i32
    %c0_i32_1 = arith.constant 0 : i32
    return %c0_i32, %c0_i32_0 : i32, i32
  }
  func.func @transform_4(%arg0: i32, %arg1: i32, %arg2: memref<16xi32, #tpu.memory_space<smem>>) -> (i32, i32, i32) {
    %c0_i32 = arith.constant 0 : i32
    %c0_i32_0 = arith.constant 0 : i32
    return %arg1, %arg0, %c0_i32 : i32, i32, i32
  }
}

</mosaic_0001>

<llo_original>
// kernel: tpu_custom_call.1
$region0: #{tpu_custom_call.1}
  #allocation0 [shape = 'u32[]', space=smem, size = 0x4, offset = 0x4, fixed_abs, tag = 'smem constant byte address 0x4 - core index']
  #allocation1 [shape = 'u32[144,128]{1,0:T(1,128)}', space=vmem, size = 0x12000, scoped, tag = 'internal scratch']
  #allocation2 [shape = 'f32[2,8,128]{2,1,0:T(8,128)}', space=vmem, size = 0x2000, scoped, tag = 'scratch operand']
  #allocation3 [shape = 's32[2]{0}', space=sflag, size = 0x8, scoped, tag = 'scratch operand']
  #allocation4 [shape = 's32[1]{0}', space=sflag, size = 0x4, scoped, tag = 'scoped memory for tpu_custom_call.1']
  #allocation5 [shape = 'u8[512]{0}', space=smem, size = 0x200, scoped, tag = 'prefetched SMEM operand 0']
  #allocation10 [shape = 's32[]', space=sflag, size = 0x4, offset = 0, fixed_abs, tag = 'sflag constant byte address 0x0 - dummy sync flag']
  #allocation11 [shape = 's32[]', space=sflag, size = 0x4, offset = 0, fixed_abs, tag = 'sflag constant byte address 0x0 - dummy sync flag']
  #allocation12 [shape = 'u32[]', space=smem, size = 0x4, offset = 0x44, fixed_abs, tag = 'smem constant byte address 0x44 - assertion arg 0']
  #allocation13 [shape = 'u32[]', space=smem, size = 0x4, offset = 0x48, fixed_abs, tag = 'smem constant byte address 0x48 - assertion arg 1']
  #allocation14 [shape = 's32[]', space=sflag, size = 0x4, offset = 0, fixed_abs, tag = 'sflag constant byte address 0x0 - dummy sync flag']
  #allocation15 [shape = 's32[]', space=sflag, size = 0x4, offset = 0, fixed_abs, tag = 'sflag constant byte address 0x0 - dummy sync flag']
  #allocation16 [shape = 's32[]', space=sflag, size = 0x4, offset = 0, fixed_abs, tag = 'sflag constant byte address 0x0 - dummy sync flag']
  #allocation17 [shape = 's32[]', space=sflag, size = 0x4, offset = 0, fixed_abs, tag = 'sflag constant byte address 0x0 - dummy sync flag']
  #allocation18 [shape = 's32[]', space=sflag, size = 0x4, offset = 0, fixed_abs, tag = 'sflag constant byte address 0x0 - dummy sync flag']
  #allocation19 [shape = 's32[]', space=sflag, size = 0x4, offset = 0, fixed_abs, tag = 'sflag constant byte address 0x0 - dummy sync flag']
  #allocation20 [shape = 's32[]', space=sflag, size = 0x4, offset = 0, fixed_abs, tag = 'sflag constant byte address 0x0 - dummy sync flag']
  #allocation21 [shape = 's32[]', space=sflag, size = 0x4, offset = 0, fixed_abs, tag = 'sflag constant byte address 0x0 - dummy sync flag']
  #allocation22 [shape = 's32[]', space=sflag, size = 0x4, offset = 0, fixed_abs, tag = 'sflag constant byte address 0x0 - dummy sync flag']
  #allocation23 [shape = 's32[]', space=sflag, size = 0x4, offset = 0, fixed_abs, tag = 'sflag constant byte address 0x0 - dummy sync flag']
  #allocation24 [shape = 's32[]', space=sflag, size = 0x4, offset = 0, fixed_abs, tag = 'sflag constant byte address 0x0 - dummy sync flag']
  #allocation25 [shape = 's32[]', space=sflag, size = 0x4, offset = 0, fixed_abs, tag = 'sflag constant byte address 0x0 - dummy sync flag']
  #allocation26 [shape = 's32[]', space=sflag, size = 0x4, offset = 0, fixed_abs, tag = 'sflag constant byte address 0x0 - dummy sync flag']
  #allocation27 [shape = 's32[]', space=sflag, size = 0x4, offset = 0, fixed_abs, tag = 'sflag constant byte address 0x0 - dummy sync flag']
  #allocation28 [shape = 's32[]', space=sflag, size = 0x4, offset = 0, fixed_abs, tag = 'sflag constant byte address 0x0 - dummy sync flag']
  #allocation29 [shape = 's32[]', space=sflag, size = 0x4, offset = 0, fixed_abs, tag = 'sflag constant byte address 0x0 - dummy sync flag']
  #allocation30 [shape = 's32[]', space=sflag, size = 0x4, offset = 0, fixed_abs, tag = 'sflag constant byte address 0x0 - dummy sync flag']
  #allocation31 [shape = 's32[]', space=sflag, size = 0x4, offset = 0, fixed_abs, tag = 'sflag constant byte address 0x0 - dummy sync flag']
  #allocation32 [shape = 's32[]', space=sflag, size = 0x4, offset = 0, fixed_abs, tag = 'sflag constant byte address 0x0 - dummy sync flag']
  #allocation33 [shape = 's32[]', space=sflag, size = 0x4, offset = 0, fixed_abs, tag = 'sflag constant byte address 0x0 - dummy sync flag']
  #allocation34 [shape = 's32[]', space=sflag, size = 0x4, offset = 0, fixed_abs, tag = 'sflag constant byte address 0x0 - dummy sync flag']
  #allocation35 [shape = 's32[]', space=sflag, size = 0x4, offset = 0, fixed_abs, tag = 'sflag constant byte address 0x0 - dummy sync flag']
  #allocation36 [shape = 's32[]', space=sflag, size = 0x4, offset = 0, fixed_abs, tag = 'sflag constant byte address 0x0 - dummy sync flag']
  #allocation37 [shape = 's32[]', space=sflag, size = 0x4, offset = 0, fixed_abs, tag = 'sflag constant byte address 0x0 - dummy sync flag']
  #allocation38 [shape = 's32[]', space=sflag, size = 0x4, offset = 0, fixed_abs, tag = 'sflag constant byte address 0x0 - dummy sync flag']
  #allocation39 [shape = 's32[]', space=sflag, size = 0x4, offset = 0, fixed_abs, tag = 'sflag constant byte address 0x0 - dummy sync flag']
  #allocation40 [shape = 's32[]', space=sflag, size = 0x4, offset = 0, fixed_abs, tag = 'sflag constant byte address 0x0 - dummy sync flag']
  #allocation41 [shape = 's32[]', space=sflag, size = 0x4, offset = 0, fixed_abs, tag = 'sflag constant byte address 0x0 - dummy sync flag']
  #allocation42 [shape = 's32[]', space=sflag, size = 0x4, offset = 0, fixed_abs, tag = 'sflag constant byte address 0x0 - dummy sync flag']
  #allocation43 [shape = 's32[]', space=sflag, size = 0x4, offset = 0, fixed_abs, tag = 'sflag constant byte address 0x0 - dummy sync flag']
  %s0 = inlined_call_operand.hbm [shape: s32[16], index: 0, kind: input, shape index: {}]
  %s1 = inlined_call_operand.hbm [shape: f32[64,128], index: 1, kind: input, shape index: {}]
  %s2 = inlined_call_operand.hbm [shape: f32[8,128], index: 2, kind: input, shape index: {}]
  %s3 = inlined_call_operand.vmem [shape: f32[1,128], index: 3, kind: input, shape index: {}]
  %s4 = inlined_call_operand.vmem [shape: f32[1,128], index: 4, kind: input, shape index: {}]
  %s5 = inlined_call_operand.hbm [shape: f32[2,8,128], index: 5, kind: output, shape index: {}]
  %s6 = sld [smem:[#allocation0]]
  $region121: #{tpu_custom_call.1} parent=0
    _
  %s8 = ssub.s32 1, %s6
  %s9 = scalar_select 0, %s8, %s6
  %11 = dma.hbm_to_smem %s0, 16, [#allocation5], [#allocation4]
  %12 = dma.done [#allocation4], 16
  %13 = sfence
  $region1: #{tpu_custom_call.1} parent=0
    #allocation6 [shape = 'u8[4096]{0}', space=vmem, size = 0x1000, scoped, tag = 'input window, operand 2, single buffered']
    #allocation7 [shape = 's32[2]{0}', space=sflag, size = 0x8, scoped, tag = 'scoped memory for tpu_custom_call.1']
    #allocation8 [shape = 's32[2]{0}', space=sflag, size = 0x8, scoped, tag = 'scoped memory for tpu_custom_call.1']
    #allocation9 [shape = 'u8[8192]{0}', space=vmem, size = 0x2000, scoped, tag = 'output window, operand 0']
    %14 = vsyncpa [#allocation7], 0
    %15 = vsyncpa [#allocation8], 0
    %s16 = scalar_lea.sflag [#allocation8], 1
    %17 = vsyncpa %s16, 0
    loop: start=0, step=1, limit=4
    $region2: #{tpu_custom_call.1} parent=1 // loop_pre_header
      _
    $region3: #{tpu_custom_call.1} parent=1 // loop_header
      %s19 = sphi 0, %s23
      %p20 = scmp.ge.s32.totalorder %s19, 4
      %s26 = sphi 0, %s38
      %s27 = sphi 0, %s34
      %s28 = sphi 0, %s26
      %s29 = sphi 0, %s27
      %s30 = sphi 0, %s28
      %s31 = sphi 0, %s29
      %s41 = sphi 0, %s43
      %s44 = sphi 0, %s41
      %s45 = sphi 0, %s44
      %s61 = sphi 0, %s45
      %s65 = sphi 0, %s65
      %s67 = sphi 0, %s65
      %s68 = sphi 0, %s67
      %s82 = sphi 0, %s68
      %s86 = sphi 0, %s86
      %s88 = sphi 0, %s86
      %s89 = sphi 0, %s88
      %s103 = sphi 0, %s89
      %s111 = sphi 0, %s113
      %s114 = sphi 0, %s111
      %s115 = sphi 0, %s114
      %s131 = sphi 0, %s115
    $region4: #{tpu_custom_call.1} parent=1 // loop_header_branch
      %22 = sbr.rel (%p20) target = $region8
    $region5: #{tpu_custom_call.1} parent=1 // loop_body
      %s24 = ssub.s32 %s19, 1
      %s25 = ssub.s32 %s19, 2
      %s32 = sadd.s32 1, %s27
      %p33 = scmp.ge.s32.totalorder %s32, 2
      %s34 = scalar_select %p33, 0, %s32
      %s35 = sadd.s32 1, %s26
      %s36 = scalar_select %p33, %s35, %s26
      %p37 = scmp.ge.s32.totalorder %s36, 1
      %s38 = scalar_select %p37, 0, %s36
      %s39 = ssub.s32 %s26, %s38
      %p40 = scmp.eq.s32.totalorder %s39, 0
      %s42 = sadd.s32 %s41, 1
      %s43 = scalar_select %p40, %s41, %s42
      %p46 = pneg %p40
      %p47 = scmp.eq.s32.totalorder %s19, 1
      %p48 = por %p46, %p47
      %p49 = scmp.ne.s32.totalorder %s41, %s44
      %p50 = scmp.eq.s32.totalorder %s19, 0
      %p51 = por %p49, %p50
      %p52 = scmp.ne.s32.totalorder %s41, %s44
      %p53 = scmp.eq.s32.totalorder %s24, 1
      %p54 = por %p52, %p53
      %p55 = scmp.ne.s32.totalorder %s44, %s45
      %p56 = scmp.eq.s32.totalorder %s24, 0
      %p57 = por %p55, %p56
      %p58 = scmp.ne.s32.totalorder %s44, %s45
      %p59 = scmp.eq.s32.totalorder %s25, 1
      %p60 = por %p58, %p59
      %p62 = scmp.ne.s32.totalorder %s45, %s61
      %p63 = scmp.eq.s32.totalorder %s25, 0
      %p64 = por %p62, %p63
      %s66 = sadd.s32 %s65, 1
      %p69 = scmp.eq.s32.totalorder %s19, 1
      %p70 = scmp.ne.s32.totalorder %s65, %s67
      %p71 = scmp.eq.s32.totalorder %s19, 0
      %p72 = por %p70, %p71
      %p73 = scmp.ne.s32.totalorder %s65, %s67
      %p74 = scmp.eq.s32.totalorder %s24, 1
      %p75 = por %p73, %p74
      %p76 = scmp.ne.s32.totalorder %s67, %s68
      %p77 = scmp.eq.s32.totalorder %s24, 0
      %p78 = por %p76, %p77
      %p79 = scmp.ne.s32.totalorder %s67, %s68
      %p80 = scmp.eq.s32.totalorder %s25, 1
      %p81 = por %p79, %p80
      %p83 = scmp.ne.s32.totalorder %s68, %s82
      %p84 = scmp.eq.s32.totalorder %s25, 0
      %p85 = por %p83, %p84
      %s87 = sadd.s32 %s86, 1
      %p90 = scmp.eq.s32.totalorder %s19, 1
      %p91 = scmp.ne.s32.totalorder %s86, %s88
      %p92 = scmp.eq.s32.totalorder %s19, 0
      %p93 = por %p91, %p92
      %p94 = scmp.ne.s32.totalorder %s86, %s88
      %p95 = scmp.eq.s32.totalorder %s24, 1
      %p96 = por %p94, %p95
      %p97 = scmp.ne.s32.totalorder %s88, %s89
      %p98 = scmp.eq.s32.totalorder %s24, 0
      %p99 = por %p97, %p98
      %p100 = scmp.ne.s32.totalorder %s88, %s89
      %p101 = scmp.eq.s32.totalorder %s25, 1
      %p102 = por %p100, %p101
      %p104 = scmp.ne.s32.totalorder %s89, %s103
      %p105 = scmp.eq.s32.totalorder %s25, 0
      %p106 = por %p104, %p105
      %s107 = ssub.s32 %s27, %s34
      %s108 = ssub.s32 %s26, %s38
      %s109 = sor.u32 %s107, %s108
      %p110 = scmp.eq.s32.totalorder %s109, 0
      %s112 = sadd.s32 %s111, 1
      %s113 = scalar_select %p110, %s111, %s112
      %p116 = pneg %p110
      %p117 = scmp.eq.s32.totalorder %s19, 1
      %p118 = por %p116, %p117
      %p119 = scmp.ne.s32.totalorder %s111, %s114
      %p120 = scmp.eq.s32.totalorder %s19, 0
      %p121 = por %p119, %p120
      %p122 = scmp.ne.s32.totalorder %s111, %s114
      %p123 = scmp.eq.s32.totalorder %s24, 1
      %p124 = por %p122, %p123
      %p125 = scmp.ne.s32.totalorder %s114, %s115
      %p126 = scmp.eq.s32.totalorder %s24, 0
      %p127 = por %p125, %p126
      %p128 = scmp.ne.s32.totalorder %s114, %s115
      %p129 = scmp.eq.s32.totalorder %s25, 1
      %p130 = por %p128, %p129
      %p132 = scmp.ne.s32.totalorder %s115, %s131
      %p133 = scmp.eq.s32.totalorder %s25, 0
      %p134 = por %p132, %p133
      %p135 = scmp.le.s32.totalorder 1, %s19
      %p136 = scmp.lt.s32.totalorder %s19, 3
      %p137 = pnand %p135, %p136
      %p138 = pneg %p137
      // Predicated region
      $region9: #{tpu_custom_call.1} parent=5 // pred_check
        _
      $region10: #{tpu_custom_call.1} parent=5 // pred_check_branch
        %140 = sbr.rel (%p137) target = $region12
      $region11: #{tpu_custom_call.1} parent=5 // pred_region
        %s141 = ssub.s32 %s19, 1
        // Predicated region
        $region13: #{tpu_custom_call.1} parent=11 // pred_check
          %p142 = pneg %p57
        $region14: #{tpu_custom_call.1} parent=11 // pred_check_branch
          %144 = sbr.rel (%p142) target = $region16
        $region15: #{tpu_custom_call.1} parent=11 // pred_region
          %s146 = ssub.s32 128, 128
          %147 = vsyncadd [#allocation7], %s146
          %s148 = smul.addr %s28, 128
          %s149 = scalar_lea.hbm %s2, %s148
          %s151 = sshll.u32 [#allocation6], 4
          %s152 = int_to_ptr.vmem [resolvable:$true] %s151
          %154 = dma.hbm_to_vmem [thread:$0]  %s149, 128, %s152, [#allocation7]
        $region16: #{tpu_custom_call.1} parent=11 // pred_fallthru
          _
        // Predicated region
        $region17: #{tpu_custom_call.1} parent=11 // pred_check
          %p155 = pneg %p78
        $region18: #{tpu_custom_call.1} parent=11 // pred_check_branch
          %157 = sbr.rel (%p155) target = $region20
        $region19: #{tpu_custom_call.1} parent=11 // pred_region
          _
        $region20: #{tpu_custom_call.1} parent=11 // pred_fallthru
          _
        // Predicated region
        $region21: #{tpu_custom_call.1} parent=11 // pred_check
          %p158 = pneg %p99
        $region22: #{tpu_custom_call.1} parent=11 // pred_check_branch
          %160 = sbr.rel (%p158) target = $region24
        $region23: #{tpu_custom_call.1} parent=11 // pred_region
          _
        $region24: #{tpu_custom_call.1} parent=11 // pred_fallthru
          _
      $region12: #{tpu_custom_call.1} parent=5 // pred_fallthru
        _
      %p161 = scmp.lt.s32.totalorder %s19, 2
      // Predicated region
      $region25: #{tpu_custom_call.1} parent=5 // pred_check
        %p162 = pneg %p161
      $region26: #{tpu_custom_call.1} parent=5 // pred_check_branch
        %164 = sbr.rel (%p162) target = $region28
      $region27: #{tpu_custom_call.1} parent=5 // pred_region
        _
      $region28: #{tpu_custom_call.1} parent=5 // pred_fallthru
        _
      %p165 = scmp.le.s32.totalorder 1, %s19
      %p166 = scmp.lt.s32.totalorder %s19, 3
      %p167 = pnand %p165, %p166
      %p168 = pneg %p167
      // Predicated region
      $region29: #{tpu_custom_call.1} parent=5 // pred_check
        _
      $region30: #{tpu_custom_call.1} parent=5 // pred_check_branch
        %170 = sbr.rel (%p167) target = $region32
      $region31: #{tpu_custom_call.1} parent=5 // pred_region
        %s171 = ssub.s32 %s19, 1
        // Predicated region
        $region33: #{tpu_custom_call.1} parent=31 // pred_check
          %p172 = pneg %p57
        $region34: #{tpu_custom_call.1} parent=31 // pred_check_branch
          %174 = sbr.rel (%p172) target = $region36
        $region35: #{tpu_custom_call.1} parent=31 // pred_region
          %175 = dma.done [#allocation7], 128
        $region36: #{tpu_custom_call.1} parent=31 // pred_fallthru
          _
        %p176 = pneg %p57
        %p177 = pneg %p54
        %p178 = pneg %p78
        %p179 = pneg %p75
        %p180 = pneg %p99
        %p181 = pneg %p96
        %p182 = pneg %p127
        %p183 = pneg %p124
        %s184 = sand.u32 %s114, 1
        %s185 = scalar_lea.sflag [#allocation8], %s184
        %s186 = sand.u32 %s114, 1
        %s187 = smul.addr %s186, 8
        %s188 = scalar_lea.vmem [#allocation9], %s187
        %s189 = sand.u32 %s29, 1
        %p190 = scmp.eq.s32.totalorder %s29, 0
        // Predicated region
        $region37: #{tpu_custom_call.1} parent=31 // pred_check
          %p191 = pneg %p190
        $region38: #{tpu_custom_call.1} parent=31 // pred_check_branch
          %193 = sbr.rel (%p191) target = $region40
        $region39: #{tpu_custom_call.1} parent=31 // pred_region
          %s194 = smul.u32 %s29, 8
          %s195 = smul.u32 %s28, 8
          %s196 = sadd.s32 %s194, %s195
          %s197 = sld [smem:[#allocation5 + %s196]]
          %p198 = scmp.gt.s32.totalorder %s197, 0
          %s199 = scalar_select %p198, %s197, 0
          %p200 = scmp.lt.s32.totalorder %s199, 63
          %s201 = scalar_select %p200, %s199, 63
          %s202 = smul.addr %s201, 16
          %s203 = scalar_lea.hbm %s1, %s202
          %s204 = smul.u32 %s189, 8
          %s205 = scalar_lea.vmem [#allocation2], %s204
          %s206 = scalar_lea.sflag [#allocation3], %s189
          // Predicated region
          $region41: #{tpu_custom_call.1} parent=39 // pred_check
            _
          $region42: #{tpu_custom_call.1} parent=39 // pred_check_branch
            %208 = sbr.rel target = $region44
          $region43: #{tpu_custom_call.1} parent=39 // pred_region
            %209 = sst [smem:[#allocation12]] [#allocation11]
            %210 = sst [smem:[#allocation13]] [#allocation10]
          $region44: #{tpu_custom_call.1} parent=39 // pred_fallthru
            _
          %212 = shalt.err (0)
          %s214 = sshll.u32 %s205, 4
          %s215 = int_to_ptr.vmem [resolvable:$true] %s214
          %217 = dma.hbm_to_vmem [thread:$0]  %s203, 16, %s215, %s206
          %s218 = sadd.s32 %s196, 1
          %s219 = sld [smem:[#allocation5 + %s218]]
          %p220 = scmp.gt.s32.totalorder %s219, 0
          %s221 = scalar_select %p220, %s219, 0
          %p222 = scmp.lt.s32.totalorder %s221, 63
          %s223 = scalar_select %p222, %s221, 63
          %s224 = smul.addr %s223, 16
          %s225 = scalar_lea.hbm %s1, %s224
          %s226 = scalar_lea.vmem %s205, 1 [#allocation2]
          // Predicated region
          $region45: #{tpu_custom_call.1} parent=39 // pred_check
            _
          $region46: #{tpu_custom_call.1} parent=39 // pred_check_branch
            %228 = sbr.rel target = $region48
          $region47: #{tpu_custom_call.1} parent=39 // pred_region
            %229 = sst [smem:[#allocation12]] [#allocation15]
            %230 = sst [smem:[#allocation13]] [#allocation14]
          $region48: #{tpu_custom_call.1} parent=39 // pred_fallthru
            _
          %232 = shalt.err (0)
          %s234 = sshll.u32 %s226, 4
          %s235 = int_to_ptr.vmem [resolvable:$true] %s234
          %237 = dma.hbm_to_vmem [thread:$0]  %s225, 16, %s235, %s206
          %s238 = sadd.s32 %s196, 2
          %s239 = sld [smem:[#allocation5 + %s238]]
          %p240 = scmp.gt.s32.totalorder %s239, 0
          %s241 = scalar_select %p240, %s239, 0
          %p242 = scmp.lt.s32.totalorder %s241, 63
          %s243 = scalar_select %p242, %s241, 63
          %s244 = smul.addr %s243, 16
          %s245 = scalar_lea.hbm %s1, %s244
          %s246 = scalar_lea.vmem %s205, 2 [#allocation2]
          // Predicated region
          $region49: #{tpu_custom_call.1} parent=39 // pred_check
            _
          $region50: #{tpu_custom_call.1} parent=39 // pred_check_branch
            %248 = sbr.rel target = $region52
          $region51: #{tpu_custom_call.1} parent=39 // pred_region
            %249 = sst [smem:[#allocation12]] [#allocation17]
            %250 = sst [smem:[#allocation13]] [#allocation16]
          $region52: #{tpu_custom_call.1} parent=39 // pred_fallthru
            _
          %252 = shalt.err (0)
          %s254 = sshll.u32 %s246, 4
          %s255 = int_to_ptr.vmem [resolvable:$true] %s254
          %257 = dma.hbm_to_vmem [thread:$0]  %s245, 16, %s255, %s206
          %s258 = sadd.s32 %s196, 3
          %s259 = sld [smem:[#allocation5 + %s258]]
          %p260 = scmp.gt.s32.totalorder %s259, 0
          %s261 = scalar_select %p260, %s259, 0
          %p262 = scmp.lt.s32.totalorder %s261, 63
          %s263 = scalar_select %p262, %s261, 63
          %s264 = smul.addr %s263, 16
          %s265 = scalar_lea.hbm %s1, %s264
          %s266 = scalar_lea.vmem %s205, 3 [#allocation2]
          // Predicated region
          $region53: #{tpu_custom_call.1} parent=39 // pred_check
            _
          $region54: #{tpu_custom_call.1} parent=39 // pred_check_branch
            %268 = sbr.rel target = $region56
          $region55: #{tpu_custom_call.1} parent=39 // pred_region
            %269 = sst [smem:[#allocation12]] [#allocation19]
            %270 = sst [smem:[#allocation13]] [#allocation18]
          $region56: #{tpu_custom_call.1} parent=39 // pred_fallthru
            _
          %272 = shalt.err (0)
          %s274 = sshll.u32 %s266, 4
          %s275 = int_to_ptr.vmem [resolvable:$true] %s274
          %277 = dma.hbm_to_vmem [thread:$0]  %s265, 16, %s275, %s206
          %s278 = sadd.s32 %s196, 4
          %s279 = sld [smem:[#allocation5 + %s278]]
          %p280 = scmp.gt.s32.totalorder %s279, 0
          %s281 = scalar_select %p280, %s279, 0
          %p282 = scmp.lt.s32.totalorder %s281, 63
          %s283 = scalar_select %p282, %s281, 63
          %s284 = smul.addr %s283, 16
          %s285 = scalar_lea.hbm %s1, %s284
          %s286 = scalar_lea.vmem %s205, 4 [#allocation2]
          // Predicated region
          $region57: #{tpu_custom_call.1} parent=39 // pred_check
            _
          $region58: #{tpu_custom_call.1} parent=39 // pred_check_branch
            %288 = sbr.rel target = $region60
          $region59: #{tpu_custom_call.1} parent=39 // pred_region
            %289 = sst [smem:[#allocation12]] [#allocation21]
            %290 = sst [smem:[#allocation13]] [#allocation20]
          $region60: #{tpu_custom_call.1} parent=39 // pred_fallthru
            _
          %292 = shalt.err (0)
          %s294 = sshll.u32 %s286, 4
          %s295 = int_to_ptr.vmem [resolvable:$true] %s294
          %297 = dma.hbm_to_vmem [thread:$0]  %s285, 16, %s295, %s206
          %s298 = sadd.s32 %s196, 5
          %s299 = sld [smem:[#allocation5 + %s298]]
          %p300 = scmp.gt.s32.totalorder %s299, 0
          %s301 = scalar_select %p300, %s299, 0
          %p302 = scmp.lt.s32.totalorder %s301, 63
          %s303 = scalar_select %p302, %s301, 63
          %s304 = smul.addr %s303, 16
          %s305 = scalar_lea.hbm %s1, %s304
          %s306 = scalar_lea.vmem %s205, 5 [#allocation2]
          // Predicated region
          $region61: #{tpu_custom_call.1} parent=39 // pred_check
            _
          $region62: #{tpu_custom_call.1} parent=39 // pred_check_branch
            %308 = sbr.rel target = $region64
          $region63: #{tpu_custom_call.1} parent=39 // pred_region
            %309 = sst [smem:[#allocation12]] [#allocation23]
            %310 = sst [smem:[#allocation13]] [#allocation22]
          $region64: #{tpu_custom_call.1} parent=39 // pred_fallthru
            _
          %312 = shalt.err (0)
          %s314 = sshll.u32 %s306, 4
          %s315 = int_to_ptr.vmem [resolvable:$true] %s314
          %317 = dma.hbm_to_vmem [thread:$0]  %s305, 16, %s315, %s206
          %s318 = sadd.s32 %s196, 6
          %s319 = sld [smem:[#allocation5 + %s318]]
          %p320 = scmp.gt.s32.totalorder %s319, 0
          %s321 = scalar_select %p320, %s319, 0
          %p322 = scmp.lt.s32.totalorder %s321, 63
          %s323 = scalar_select %p322, %s321, 63
          %s324 = smul.addr %s323, 16
          %s325 = scalar_lea.hbm %s1, %s324
          %s326 = scalar_lea.vmem %s205, 6 [#allocation2]
          // Predicated region
          $region65: #{tpu_custom_call.1} parent=39 // pred_check
            _
          $region66: #{tpu_custom_call.1} parent=39 // pred_check_branch
            %328 = sbr.rel target = $region68
          $region67: #{tpu_custom_call.1} parent=39 // pred_region
            %329 = sst [smem:[#allocation12]] [#allocation25]
            %330 = sst [smem:[#allocation13]] [#allocation24]
          $region68: #{tpu_custom_call.1} parent=39 // pred_fallthru
            _
          %332 = shalt.err (0)
          %s334 = sshll.u32 %s326, 4
          %s335 = int_to_ptr.vmem [resolvable:$true] %s334
          %337 = dma.hbm_to_vmem [thread:$0]  %s325, 16, %s335, %s206
          %s338 = sadd.s32 %s196, 7
          %s339 = sld [smem:[#allocation5 + %s338]]
          %p340 = scmp.gt.s32.totalorder %s339, 0
          %s341 = scalar_select %p340, %s339, 0
          %p342 = scmp.lt.s32.totalorder %s341, 63
          %s343 = scalar_select %p342, %s341, 63
          %s344 = smul.addr %s343, 16
          %s345 = scalar_lea.hbm %s1, %s344
          %s346 = scalar_lea.vmem %s205, 7 [#allocation2]
          // Predicated region
          $region69: #{tpu_custom_call.1} parent=39 // pred_check
            _
          $region70: #{tpu_custom_call.1} parent=39 // pred_check_branch
            %348 = sbr.rel target = $region72
          $region71: #{tpu_custom_call.1} parent=39 // pred_region
            %349 = sst [smem:[#allocation12]] [#allocation27]
            %350 = sst [smem:[#allocation13]] [#allocation26]
          $region72: #{tpu_custom_call.1} parent=39 // pred_fallthru
            _
          %352 = shalt.err (0)
          %s354 = sshll.u32 %s346, 4
          %s355 = int_to_ptr.vmem [resolvable:$true] %s354
          %357 = dma.hbm_to_vmem [thread:$0]  %s345, 16, %s355, %s206
        $region40: #{tpu_custom_call.1} parent=31 // pred_fallthru
          _
        %s358 = sadd.s32 %s29, 1
        %p359 = scmp.lt.s32.totalorder %s358, 2
        // Predicated region
        $region73: #{tpu_custom_call.1} parent=31 // pred_check
          %p360 = pneg %p359
        $region74: #{tpu_custom_call.1} parent=31 // pred_check_branch
          %362 = sbr.rel (%p360) target = $region76
        $region75: #{tpu_custom_call.1} parent=31 // pred_region
          %s363 = ssub.s32 1, %s189
          %s364 = smul.u32 %s358, 8
          %s365 = smul.u32 %s28, 8
          %s366 = sadd.s32 %s364, %s365
          %s367 = sld [smem:[#allocation5 + %s366]]
          %p368 = scmp.gt.s32.totalorder %s367, 0
          %s369 = scalar_select %p368, %s367, 0
          %p370 = scmp.lt.s32.totalorder %s369, 63
          %s371 = scalar_select %p370, %s369, 63
          %s372 = smul.addr %s371, 16
          %s373 = scalar_lea.hbm %s1, %s372
          %s374 = smul.u32 %s363, 8
          %s375 = scalar_lea.vmem [#allocation2], %s374
          %s376 = scalar_lea.sflag [#allocation3], %s363
          // Predicated region
          $region77: #{tpu_custom_call.1} parent=75 // pred_check
            _
          $region78: #{tpu_custom_call.1} parent=75 // pred_check_branch
            %378 = sbr.rel target = $region80
          $region79: #{tpu_custom_call.1} parent=75 // pred_region
            %379 = sst [smem:[#allocation12]] [#allocation29]
            %380 = sst [smem:[#allocation13]] [#allocation28]
          $region80: #{tpu_custom_call.1} parent=75 // pred_fallthru
            _
          %382 = shalt.err (0)
          %s384 = sshll.u32 %s375, 4
          %s385 = int_to_ptr.vmem [resolvable:$true] %s384
          %387 = dma.hbm_to_vmem [thread:$0]  %s373, 16, %s385, %s376
          %s388 = sadd.s32 %s366, 1
          %s389 = sld [smem:[#allocation5 + %s388]]
          %p390 = scmp.gt.s32.totalorder %s389, 0
          %s391 = scalar_select %p390, %s389, 0
          %p392 = scmp.lt.s32.totalorder %s391, 63
          %s393 = scalar_select %p392, %s391, 63
          %s394 = smul.addr %s393, 16
          %s395 = scalar_lea.hbm %s1, %s394
          %s396 = scalar_lea.vmem %s375, 1 [#allocation2]
          // Predicated region
          $region81: #{tpu_custom_call.1} parent=75 // pred_check
            _
          $region82: #{tpu_custom_call.1} parent=75 // pred_check_branch
            %398 = sbr.rel target = $region84
          $region83: #{tpu_custom_call.1} parent=75 // pred_region
            %399 = sst [smem:[#allocation12]] [#allocation31]
            %400 = sst [smem:[#allocation13]] [#allocation30]
          $region84: #{tpu_custom_call.1} parent=75 // pred_fallthru
            _
          %402 = shalt.err (0)
          %s404 = sshll.u32 %s396, 4
          %s405 = int_to_ptr.vmem [resolvable:$true] %s404
          %407 = dma.hbm_to_vmem [thread:$0]  %s395, 16, %s405, %s376
          %s408 = sadd.s32 %s366, 2
          %s409 = sld [smem:[#allocation5 + %s408]]
          %p410 = scmp.gt.s32.totalorder %s409, 0
          %s411 = scalar_select %p410, %s409, 0
          %p412 = scmp.lt.s32.totalorder %s411, 63
          %s413 = scalar_select %p412, %s411, 63
          %s414 = smul.addr %s413, 16
          %s415 = scalar_lea.hbm %s1, %s414
          %s416 = scalar_lea.vmem %s375, 2 [#allocation2]
          // Predicated region
          $region85: #{tpu_custom_call.1} parent=75 // pred_check
            _
          $region86: #{tpu_custom_call.1} parent=75 // pred_check_branch
            %418 = sbr.rel target = $region88
          $region87: #{tpu_custom_call.1} parent=75 // pred_region
            %419 = sst [smem:[#allocation12]] [#allocation33]
            %420 = sst [smem:[#allocation13]] [#allocation32]
          $region88: #{tpu_custom_call.1} parent=75 // pred_fallthru
            _
          %422 = shalt.err (0)
          %s424 = sshll.u32 %s416, 4
          %s425 = int_to_ptr.vmem [resolvable:$true] %s424
          %427 = dma.hbm_to_vmem [thread:$0]  %s415, 16, %s425, %s376
          %s428 = sadd.s32 %s366, 3
          %s429 = sld [smem:[#allocation5 + %s428]]
          %p430 = scmp.gt.s32.totalorder %s429, 0
          %s431 = scalar_select %p430, %s429, 0
          %p432 = scmp.lt.s32.totalorder %s431, 63
          %s433 = scalar_select %p432, %s431, 63
          %s434 = smul.addr %s433, 16
          %s435 = scalar_lea.hbm %s1, %s434
          %s436 = scalar_lea.vmem %s375, 3 [#allocation2]
          // Predicated region
          $region89: #{tpu_custom_call.1} parent=75 // pred_check
            _
          $region90: #{tpu_custom_call.1} parent=75 // pred_check_branch
            %438 = sbr.rel target = $region92
          $region91: #{tpu_custom_call.1} parent=75 // pred_region
            %439 = sst [smem:[#allocation12]] [#allocation35]
            %440 = sst [smem:[#allocation13]] [#allocation34]
          $region92: #{tpu_custom_call.1} parent=75 // pred_fallthru
            _
          %442 = shalt.err (0)
          %s444 = sshll.u32 %s436, 4
          %s445 = int_to_ptr.vmem [resolvable:$true] %s444
          %447 = dma.hbm_to_vmem [thread:$0]  %s435, 16, %s445, %s376
          %s448 = sadd.s32 %s366, 4
          %s449 = sld [smem:[#allocation5 + %s448]]
          %p450 = scmp.gt.s32.totalorder %s449, 0
          %s451 = scalar_select %p450, %s449, 0
          %p452 = scmp.lt.s32.totalorder %s451, 63
          %s453 = scalar_select %p452, %s451, 63
          %s454 = smul.addr %s453, 16
          %s455 = scalar_lea.hbm %s1, %s454
          %s456 = scalar_lea.vmem %s375, 4 [#allocation2]
          // Predicated region
          $region93: #{tpu_custom_call.1} parent=75 // pred_check
            _
          $region94: #{tpu_custom_call.1} parent=75 // pred_check_branch
            %458 = sbr.rel target = $region96
          $region95: #{tpu_custom_call.1} parent=75 // pred_region
            %459 = sst [smem:[#allocation12]] [#allocation37]
            %460 = sst [smem:[#allocation13]] [#allocation36]
          $region96: #{tpu_custom_call.1} parent=75 // pred_fallthru
            _
          %462 = shalt.err (0)
          %s464 = sshll.u32 %s456, 4
          %s465 = int_to_ptr.vmem [resolvable:$true] %s464
          %467 = dma.hbm_to_vmem [thread:$0]  %s455, 16, %s465, %s376
          %s468 = sadd.s32 %s366, 5
          %s469 = sld [smem:[#allocation5 + %s468]]
          %p470 = scmp.gt.s32.totalorder %s469, 0
          %s471 = scalar_select %p470, %s469, 0
          %p472 = scmp.lt.s32.totalorder %s471, 63
          %s473 = scalar_select %p472, %s471, 63
          %s474 = smul.addr %s473, 16
          %s475 = scalar_lea.hbm %s1, %s474
          %s476 = scalar_lea.vmem %s375, 5 [#allocation2]
          // Predicated region
          $region97: #{tpu_custom_call.1} parent=75 // pred_check
            _
          $region98: #{tpu_custom_call.1} parent=75 // pred_check_branch
            %478 = sbr.rel target = $region100
          $region99: #{tpu_custom_call.1} parent=75 // pred_region
            %479 = sst [smem:[#allocation12]] [#allocation39]
            %480 = sst [smem:[#allocation13]] [#allocation38]
          $region100: #{tpu_custom_call.1} parent=75 // pred_fallthru
            _
          %482 = shalt.err (0)
          %s484 = sshll.u32 %s476, 4
          %s485 = int_to_ptr.vmem [resolvable:$true] %s484
          %487 = dma.hbm_to_vmem [thread:$0]  %s475, 16, %s485, %s376
          %s488 = sadd.s32 %s366, 6
          %s489 = sld [smem:[#allocation5 + %s488]]
          %p490 = scmp.gt.s32.totalorder %s489, 0
          %s491 = scalar_select %p490, %s489, 0
          %p492 = scmp.lt.s32.totalorder %s491, 63
          %s493 = scalar_select %p492, %s491, 63
          %s494 = smul.addr %s493, 16
          %s495 = scalar_lea.hbm %s1, %s494
          %s496 = scalar_lea.vmem %s375, 6 [#allocation2]
          // Predicated region
          $region101: #{tpu_custom_call.1} parent=75 // pred_check
            _
          $region102: #{tpu_custom_call.1} parent=75 // pred_check_branch
            %498 = sbr.rel target = $region104
          $region103: #{tpu_custom_call.1} parent=75 // pred_region
            %499 = sst [smem:[#allocation12]] [#allocation41]
            %500 = sst [smem:[#allocation13]] [#allocation40]
          $region104: #{tpu_custom_call.1} parent=75 // pred_fallthru
            _
          %502 = shalt.err (0)
          %s504 = sshll.u32 %s496, 4
          %s505 = int_to_ptr.vmem [resolvable:$true] %s504
          %507 = dma.hbm_to_vmem [thread:$0]  %s495, 16, %s505, %s376
          %s508 = sadd.s32 %s366, 7
          %s509 = sld [smem:[#allocation5 + %s508]]
          %p510 = scmp.gt.s32.totalorder %s509, 0
          %s511 = scalar_select %p510, %s509, 0
          %p512 = scmp.lt.s32.totalorder %s511, 63
          %s513 = scalar_select %p512, %s511, 63
          %s514 = smul.addr %s513, 16
          %s515 = scalar_lea.hbm %s1, %s514
          %s516 = scalar_lea.vmem %s375, 7 [#allocation2]
          // Predicated region
          $region105: #{tpu_custom_call.1} parent=75 // pred_check
            _
          $region106: #{tpu_custom_call.1} parent=75 // pred_check_branch
            %518 = sbr.rel target = $region108
          $region107: #{tpu_custom_call.1} parent=75 // pred_region
            %519 = sst [smem:[#allocation12]] [#allocation43]
            %520 = sst [smem:[#allocation13]] [#allocation42]
          $region108: #{tpu_custom_call.1} parent=75 // pred_fallthru
            _
          %522 = shalt.err (0)
          %s524 = sshll.u32 %s516, 4
          %s525 = int_to_ptr.vmem [resolvable:$true] %s524
          %527 = dma.hbm_to_vmem [thread:$0]  %s515, 16, %s525, %s376
        $region76: #{tpu_custom_call.1} parent=31 // pred_fallthru
          _
        %s528 = smul.u32 %s189, 8
        %s529 = scalar_lea.vmem [#allocation2], %s528
        %s530 = scalar_lea.sflag [#allocation3], %s189
        %s531 = smul.u32 8, 1
        %s532 = sshll.u32 %s531, 4
        %533 = dma.done %s530, %s532
        %v534 = vld [vmem:[%s529] sm:$0xff]
        %v535 = vmul.f32 %v534, 11.313708
        %v536 = vld [vmem:[#allocation6] sm:$0xff]
        %v537 = vadd.f32 %v535, %v536
        %538 = vadd.xlane.f32.xlu0 %v537
        %v539 = vpop.xlane.xlu0 %538
        %v540 = vrcp.pop 128.0
        %v541 = vmul.f32 %v539, %v540
        %v542 = vsub.f32 %v537, %v541
        %v543 = vmul.f32 %v542, %v542
        %544 = vadd.xlane.f32.xlu0 %v543
        %v545 = vpop.xlane.xlu0 %544
        %v546 = vmul.f32 %v545, %v540
        %v547 = vadd.f32 %v546, 1e-05
        %v548 = vrsqrt.pop %v547
        %v549 = vmul.f32 %v542, %v548
        %v550 = vld [vmem:[%s3] sm:$0x1]
        %v552 = vlaneseq
        %v553 = vshrl.u32 %v552, 7
        %v554 = vsub.s32 0, %v553
        %v555 = vrot.slane %v550, %v554
        %v557 = vmul.f32 %v549, %v555
        %v558 = vld [vmem:[%s4] sm:$0x1]
        %v560 = vlaneseq
        %v561 = vshrl.u32 %v560, 7
        %v562 = vsub.s32 0, %v561
        %v563 = vrot.slane %v558, %v562
        %v565 = vadd.f32 %v557, %v563
        %566 = vst [vmem:[%s188] sm:$0xff] %v565
        %s567 = sand.u32 %s114, 1
        %s568 = scalar_lea.sflag [#allocation8], %s567
        %s569 = sand.u32 %s114, 1
        %s570 = smul.addr %s569, 8
        %s571 = scalar_lea.vmem [#allocation9], %s570
        // Predicated region
        $region109: #{tpu_custom_call.1} parent=31 // pred_check
          %p572 = pneg %p124
        $region110: #{tpu_custom_call.1} parent=31 // pred_check_branch
          %574 = sbr.rel (%p572) target = $region112
        $region111: #{tpu_custom_call.1} parent=31 // pred_region
          %s576 = ssub.s32 128, 128
          %577 = vsyncadd %s568, %s576
          %s578 = sadd.s32 %s28, %s29
          %s579 = smul.addr %s578, 128
          %s580 = scalar_lea.hbm %s5, %s579
          %s582 = sshll.u32 %s571, 4
          %s583 = int_to_ptr.vmem [resolvable:$true] %s582
          %585 = dma.vmem_to_hbm [thread:$0]  %s583, 128, %s580, %s568
        $region112: #{tpu_custom_call.1} parent=31 // pred_fallthru
          _
      $region32: #{tpu_custom_call.1} parent=5 // pred_fallthru
        _
      %p586 = scmp.le.s32.totalorder 2, %s19
      // Predicated region
      $region113: #{tpu_custom_call.1} parent=5 // pred_check
        %p587 = pneg %p586
      $region114: #{tpu_custom_call.1} parent=5 // pred_check_branch
        %589 = sbr.rel (%p587) target = $region116
      $region115: #{tpu_custom_call.1} parent=5 // pred_region
        %s590 = ssub.s32 %s19, 2
        // Predicated region
        $region117: #{tpu_custom_call.1} parent=115 // pred_check
          %p591 = pneg %p130
        $region118: #{tpu_custom_call.1} parent=115 // pred_check_branch
          %593 = sbr.rel (%p591) target = $region120
        $region119: #{tpu_custom_call.1} parent=115 // pred_region
          %s594 = sand.u32 %s115, 1
          %s595 = scalar_lea.sflag [#allocation8], %s594
          %s596 = sand.u32 %s115, 1
          %s597 = smul.addr %s596, 8
          %s598 = scalar_lea.vmem [#allocation9], %s597
          %599 = dma.done %s595, 128
        $region120: #{tpu_custom_call.1} parent=115 // pred_fallthru
          _
      $region116: #{tpu_custom_call.1} parent=5 // pred_fallthru
        _
    $region6: #{tpu_custom_call.1} parent=1 // loop_footer
      %s23 = sadd.s32 1, %s19
    $region7: #{tpu_custom_call.1} parent=1 // loop_footer_branch
      %18 = sbr.rel target = $region3
    $region8: #{tpu_custom_call.1} parent=1 // loop_exit
      _
    %600 = vsyncpa [#allocation7], 1
    %s601 = scalar_lea.sflag [#allocation7], 1
    %602 = vsyncpa %s601, 1
    %603 = vsyncpa [#allocation8], 1
    %s604 = scalar_lea.sflag [#allocation8], 1
    %605 = vsyncpa %s604, 1
  %606 = vsyncmov [#allocation3]
  %s607 = vpop.sfrf %606
  %p608 = scmp.eq.s32.totalorder %s607, 0
  %p609 = pneg %p608
  %611 = shalt.err (%p609)
  %s612 = scalar_lea.sflag [#allocation3], 1
  %613 = vsyncmov %s612
  %s614 = vpop.sfrf %613
  %p615 = scmp.eq.s32.totalorder %s614, 0
  %p616 = pneg %p615
  %618 = shalt.err (%p616)

</llo_original>
